<compile_context>
chip_gen: v5e
topology: v5e:2x2
jax: 0.10.0
libtpu: 0.0.40
codegen_flags: <defaults>
</compile_context>

<pallas_src>
import functools

import jax
import jax.numpy as jnp
from jax import lax
from jax.experimental import pallas as pl
from jax.experimental.pallas import tpu as pltpu


# ----------------------------- helpers -----------------------------

def _round_up(x, m):
    return (x + m - 1) // m * m


def _pad_rows(a, rows):
    if a.shape[0] == rows:
        return a
    return jnp.pad(a, ((0, rows - a.shape[0]), (0, 0)))


# ------------------ fused matmul (single-K, single-N, rows grid) ------------------

def _mm_kernel(x_ref, w_ref, *rest, has_bias, has_residual, activation):
    rest = list(rest)
    b_ref = rest.pop(0) if has_bias else None
    r_ref = rest.pop(0) if has_residual else None
    (o_ref,) = rest
    # bf16 operands into the MXU (weights already bf16), f32 accumulation.
    y = jnp.dot(x_ref[...].astype(jnp.bfloat16), w_ref[...],
                preferred_element_type=jnp.float32)
    if has_bias:
        y = y + b_ref[...]
    if activation == "quick_gelu":
        y = y * jax.nn.sigmoid(1.702 * y)          # CLIP's QuickGELU
    if has_residual:
        y = y + r_ref[...].astype(jnp.float32)
    o_ref[...] = y.astype(o_ref.dtype)


def matmul_fused(x, w, b=None, *, residual=None, activation=None,
                 out_dtype=jnp.float32, tm_max=256):
    """out = act(x @ w + b) [+ residual].  Single K/N block; grid over row tiles."""
    M, K = x.shape
    Kw, N = w.shape
    assert K == Kw
    tm = min(tm_max, _round_up(M, 8))
    Mp = _round_up(M, tm)
    xp = _pad_rows(x, Mp)

    in_specs = [pl.BlockSpec((tm, K), lambda i: (i, 0)),
                pl.BlockSpec((K, N), lambda i: (0, 0))]     # resident weight
    args = [xp, w]
    if b is not None:
        in_specs.append(pl.BlockSpec((1, N), lambda i: (0, 0)))
        args.append(b)
    if residual is not None:
        in_specs.append(pl.BlockSpec((tm, N), lambda i: (i, 0)))
        args.append(_pad_rows(residual, Mp))

    out = pl.pallas_call(
        functools.partial(_mm_kernel, has_bias=b is not None,
                          has_residual=residual is not None, activation=activation),
        grid=(Mp // tm,),
        in_specs=in_specs,
        out_specs=pl.BlockSpec((tm, N), lambda i: (i, 0)),
        out_shape=jax.ShapeDtypeStruct((Mp, N), out_dtype),
        compiler_params=pltpu.CompilerParams(dimension_semantics=("parallel",)),
    )(*args)
    return out if Mp == M else out[:M]


# ------------------ LayerNorm fused into the consuming matmul ------------------

def _ln_mm_kernel(x_ref, g_ref, beta_ref, w_ref, *rest, has_bias, activation, eps):
    rest = list(rest)
    b_ref = rest.pop(0) if has_bias else None
    (o_ref,) = rest
    x = x_ref[...].astype(jnp.float32)
    mu = jnp.mean(x, axis=-1, keepdims=True)
    xc = x - mu
    var = jnp.mean(xc * xc, axis=-1, keepdims=True)
    h = (xc * lax.rsqrt(var + eps) * g_ref[...] + beta_ref[...]).astype(jnp.bfloat16)
    y = jnp.dot(h, w_ref[...], preferred_element_type=jnp.float32)
    if has_bias:
        y = y + b_ref[...]
    if activation == "quick_gelu":
        y = y * jax.nn.sigmoid(1.702 * y)
    o_ref[...] = y.astype(o_ref.dtype)


def ln_matmul_fused(x, g, beta, w, b=None, *, activation=None,
                    out_dtype=jnp.bfloat16, eps=1e-5, tm_max=256):
    """out = act(LayerNorm(x) @ w + b) — LN computed in the matmul prologue."""
    M, K = x.shape
    Kw, N = w.shape
    assert K == Kw
    tm = min(tm_max, _round_up(M, 8))
    Mp = _round_up(M, tm)
    xp = _pad_rows(x, Mp)

    in_specs = [pl.BlockSpec((tm, K), lambda i: (i, 0)),
                pl.BlockSpec((1, K), lambda i: (0, 0)),
                pl.BlockSpec((1, K), lambda i: (0, 0)),
                pl.BlockSpec((K, N), lambda i: (0, 0))]
    args = [xp, g, beta, w]
    if b is not None:
        in_specs.append(pl.BlockSpec((1, N), lambda i: (0, 0)))
        args.append(b)

    out = pl.pallas_call(
        functools.partial(_ln_mm_kernel, has_bias=b is not None,
                          activation=activation, eps=eps),
        grid=(Mp // tm,),
        in_specs=in_specs,
        out_specs=pl.BlockSpec((tm, N), lambda i: (i, 0)),
        out_shape=jax.ShapeDtypeStruct((Mp, N), out_dtype),
        compiler_params=pltpu.CompilerParams(dimension_semantics=("parallel",)),
    )(*args)
    return out if Mp == M else out[:M]


# ----------------------------- standalone layernorm (ln_pre) -----------------------------

def _layernorm_kernel(x_ref, g_ref, b_ref, o_ref, *, eps):
    x = x_ref[...].astype(jnp.float32)
    mean = jnp.mean(x, axis=-1, keepdims=True)
    xc = x - mean
    var = jnp.mean(xc * xc, axis=-1, keepdims=True)
    inv = lax.rsqrt(var + eps)
    o_ref[...] = (xc * inv * g_ref[...] + b_ref[...]).astype(o_ref.dtype)


def layernorm(x2d, g, b, *, eps=1e-5, out_dtype=jnp.float32, tm_max=512):
    M, D = x2d.shape
    tm = min(tm_max, _round_up(M, 8))
    Mp = _round_up(M, tm)
    xp = _pad_rows(x2d, Mp)
    out = pl.pallas_call(
        functools.partial(_layernorm_kernel, eps=eps),
        grid=(Mp // tm,),
        in_specs=[pl.BlockSpec((tm, D), lambda i: (i, 0)),
                  pl.BlockSpec((1, D), lambda i: (0, 0)),
                  pl.BlockSpec((1, D), lambda i: (0, 0))],
        out_specs=pl.BlockSpec((tm, D), lambda i: (i, 0)),
        out_shape=jax.ShapeDtypeStruct((Mp, D), out_dtype),
        compiler_params=pltpu.CompilerParams(dimension_semantics=("parallel",)),
    )(xp, g, b)
    return out if Mp == M else out[:M]


# ----------------------- attention (one-shot softmax, all heads) -----------------------

def _attention_kernel(qkv_ref, o_ref, *, n_heads, head_dim, model_dim, seq_len):
    # qkv_ref block: (1, Sp, 3D) bf16, laid out [q | k | v] along the last dim.
    Sp = qkv_ref.shape[1]
    D = model_dim
    kv_idx = lax.broadcasted_iota(jnp.int32, (1, Sp), 1)
    # large finite negative (not -inf) so padded columns are robustly zeroed by exp
    mask_bias = jnp.where(kv_idx < seq_len, jnp.float32(0.0), jnp.float32(-1e30))

    outs = []
    for h in range(n_heads):              # static unroll over heads
        lo = h * head_dim
        qh = qkv_ref[0, :, lo:lo + head_dim]                  # (Sp, dh) bf16 (pre-scaled)
        kh = qkv_ref[0, :, D + lo:D + lo + head_dim]
        vh = qkv_ref[0, :, 2 * D + lo:2 * D + lo + head_dim]
        s = lax.dot_general(qh, kh, (((1,), (1,)), ((), ())),
                            preferred_element_type=jnp.float32)   # (Sp, Sp)
        s = s + mask_bias
        m = jnp.max(s, axis=-1, keepdims=True)
        p = jnp.exp(s - m)
        l = jnp.sum(p, axis=-1, keepdims=True)
        oh = jnp.dot(p.astype(jnp.bfloat16), vh, preferred_element_type=jnp.float32)
        outs.append(oh * pl.reciprocal(l, approx=False))
    # one lane-dense (Sp, D) store
    o_ref[0] = jnp.concatenate(outs, axis=-1).astype(o_ref.dtype)


def attention(qkv, *, n_heads, seq_len):
    """qkv: [B, Sp, 3D] bf16 (q already scaled by 1/sqrt(dh)).  Returns [B, Sp, D] bf16."""
    B, Sp, threeD = qkv.shape
    D = threeD // 3
    dh = D // n_heads
    return pl.pallas_call(
        functools.partial(_attention_kernel, n_heads=n_heads, head_dim=dh,
                          model_dim=D, seq_len=seq_len),
        grid=(B,),
        in_specs=[pl.BlockSpec((1, Sp, threeD), lambda b: (b, 0, 0))],
        out_specs=pl.BlockSpec((1, Sp, D), lambda b: (b, 0, 0)),
        out_shape=jax.ShapeDtypeStruct((B, Sp, D), jnp.bfloat16),
        compiler_params=pltpu.CompilerParams(dimension_semantics=("parallel",)),
    )(qkv)


# --------------------------- parameter construction ---------------------------

def init_params(key, *, C, P, D, L, S, out_dim):
    keys = iter(jax.random.split(key, 8 + 6 * L))

    def nrm(shape, std=0.02):
        return (std * jax.random.normal(next(keys), shape)).astype(jnp.float32)

    params = {
        "patch_w": nrm((C * P * P, D)),                 # conv1 weight reshaped to [in, out]
        "cls": nrm((D,)),
        "pos": nrm((S, D)),
        "ln_pre_g": jnp.ones((D,), jnp.float32),
        "ln_pre_b": jnp.zeros((D,), jnp.float32),
        "ln_post_g": jnp.ones((D,), jnp.float32),
        "ln_post_b": jnp.zeros((D,), jnp.float32),
        "proj": nrm((D, out_dim)),
        "layers": [],
    }
    for _ in range(L):
        params["layers"].append({
            "ln1_g": jnp.ones((D,), jnp.float32),
            "ln1_b": jnp.zeros((D,), jnp.float32),
            "qkv_w": nrm((D, 3 * D)),                   # torch in_proj_weight.T
            "qkv_b": jnp.zeros((3 * D,), jnp.float32),
            "out_w": nrm((D, D)),
            "out_b": jnp.zeros((D,), jnp.float32),
            "ln2_g": jnp.ones((D,), jnp.float32),
            "ln2_b": jnp.zeros((D,), jnp.float32),
            "fc_w": nrm((D, 4 * D)),
            "fc_b": jnp.zeros((4 * D,), jnp.float32),
            "cproj_w": nrm((4 * D, D)),
            "cproj_b": jnp.zeros((D,), jnp.float32),
        })
    return params


def prepare_params(params, *, n_heads):
    """One-time inference prep: bf16 weights, 1/sqrt(dh) folded into Q projection,
    biases / LN params reshaped to (1, N) f32 rows."""
    D = params["patch_w"].shape[1]
    dh = D // n_heads
    scale = float(dh) ** -0.5
    qscale = jnp.concatenate([jnp.full((D,), scale, jnp.float32),
                              jnp.ones((2 * D,), jnp.float32)])

    def row(v):
        return v.reshape(1, -1).astype(jnp.float32)

    prepped = {
        "patch_w": params["patch_w"].astype(jnp.bfloat16),
        "cls": params["cls"].astype(jnp.float32),
        "pos": params["pos"].astype(jnp.float32),
        "ln_pre_g": row(params["ln_pre_g"]), "ln_pre_b": row(params["ln_pre_b"]),
        "ln_post_g": row(params["ln_post_g"]), "ln_post_b": row(params["ln_post_b"]),
        "proj": params["proj"].astype(jnp.bfloat16),
        "layers": [],
    }
    for lyr in params["layers"]:
        prepped["layers"].append({
            "ln1_g": row(lyr["ln1_g"]), "ln1_b": row(lyr["ln1_b"]),
            "qkv_w": (lyr["qkv_w"] * qscale[None, :]).astype(jnp.bfloat16),
            "qkv_b": row(lyr["qkv_b"] * qscale),
            "out_w": lyr["out_w"].astype(jnp.bfloat16),
            "out_b": row(lyr["out_b"]),
            "ln2_g": row(lyr["ln2_g"]), "ln2_b": row(lyr["ln2_b"]),
            "fc_w": lyr["fc_w"].astype(jnp.bfloat16),
            "fc_b": row(lyr["fc_b"]),
            "cproj_w": lyr["cproj_w"].astype(jnp.bfloat16),
            "cproj_b": row(lyr["cproj_b"]),
        })
    return prepped


# ------------------------------- forward pass -------------------------------

def clip_encode_image(images, params, *, P, H):
    # images: [B, C, Him, Wim]  (NCHW, PyTorch conv convention)
    B, C, Him, Wim = images.shape
    gh, gw = Him // P, Wim // P
    n_patch = gh * gw
    D = params["patch_w"].shape[1]

    # --- patch embedding: conv(kernel=stride=P, bias=False) as a matmul ---
    x = images.reshape(B, C, gh, P, gw, P)
    x = x.transpose(0, 2, 4, 1, 3, 5).reshape(B * n_patch, C * P * P)
    x = matmul_fused(x, params["patch_w"], None, out_dtype=jnp.float32)
    x = x.reshape(B, n_patch, D)

    # --- class token + positional embedding ---
    cls = jnp.broadcast_to(params["cls"].reshape(1, 1, D), (B, 1, D))
    x = jnp.concatenate([cls, x], axis=1)                         # [B, S, D]
    S = x.shape[1]
    x = x + params["pos"].reshape(1, S, D)

    # --- pad sequence once; padded kv masked inside attention ---
    Sp = _round_up(S, 8)
    if Sp != S:
        x = jnp.pad(x, ((0, 0), (0, Sp - S), (0, 0)))
    Mr = B * Sp

    # --- pre-LN (residual stream stays f32) ---
    x_rows = layernorm(x.reshape(Mr, D), params["ln_pre_g"], params["ln_pre_b"],
                       out_dtype=jnp.float32)

    for lyr in params["layers"]:
        # ---- attention block: (LN1 + qkv proj) fused -> attention -> out proj (+residual) ----
        qkv = ln_matmul_fused(x_rows, lyr["ln1_g"], lyr["ln1_b"],
                              lyr["qkv_w"], lyr["qkv_b"], out_dtype=jnp.bfloat16)
        o = attention(qkv.reshape(B, Sp, 3 * D), n_heads=H, seq_len=S)   # [B, Sp, D] bf16
        x_rows = matmul_fused(o.reshape(Mr, D), lyr["out_w"], lyr["out_b"],
                              residual=x_rows, out_dtype=jnp.float32)

        # ---- MLP block: (LN2 + fc1 + QuickGELU) fused -> cproj (+residual) ----
        h = ln_matmul_fused(x_rows, lyr["ln2_g"], lyr["ln2_b"],
                            lyr["fc_w"], lyr["fc_b"], activation="quick_gelu",
                            out_dtype=jnp.bfloat16)
        x_rows = matmul_fused(h, lyr["cproj_w"], lyr["cproj_b"],
                              residual=x_rows, out_dtype=jnp.float32)

    # --- post-LN on CLS token fused with the final projection ---
    cls_tok = x_rows.reshape(B, Sp, D)[:, 0, :]                   # [B, D] f32
    out = ln_matmul_fused(cls_tok, params["ln_post_g"], params["ln_post_b"],
                          params["proj"], None, out_dtype=jnp.float32)
    return out                                                     # [B, out_dim]


# TODO(synk): text branch (encode_text), clip.load checkpoint import and the
#             save()/load() torch-serialization helpers are not implemented;
#             forward covers the images-only path.

if __name__ == "__main__":
    # Small synthetic config consistent with a CLIP ViT image tower.
    B, C, IMG, P = 2, 3, 16, 8          # -> 2x2 = 4 patches, seq = 5 (with CLS)
    D, H, L, OUT = 32, 4, 2, 16
    S = (IMG // P) ** 2 + 1

    key = jax.random.PRNGKey(0)
    k_img, k_par = jax.random.split(key)
    images = jax.random.normal(k_img, (B, C, IMG, IMG), dtype=jnp.float32)
    raw = init_params(k_par, C=C, P=P, D=D, L=L, S=S, out_dim=OUT)
    params = prepare_params(raw, n_heads=H)

    encode = jax.jit(functools.partial(clip_encode_image, P=P, H=H))
    out = encode(images, params)
    out = jax.block_until_ready(out)
    assert out.shape == (B, OUT) and out.dtype == jnp.float32
    assert bool(jnp.all(jnp.isfinite(out)))
    print("KERNEL_OK")
</pallas_src>

<mosaic_0001>
module attributes {stable_mosaic.version = 11 : i64} {
  func.func @_mm_kernel(%arg0: i32, %arg1: memref<8x192xf32, #tpu.memory_space<vmem>>, %arg2: memref<192x32xbf16, #tpu.memory_space<vmem>>, %arg3: memref<8x32xf32, #tpu.memory_space<vmem>>) attributes {dimension_semantics = [#tpu.dimension_semantics<parallel>], iteration_bounds = array<i64: 1>, scalar_prefetch = 0 : i64, scratch_operands = 0 : i64, tpu.core_type = #tpu.core_type<tc>, window_params = [{transform_indices = @transform_0, window_bounds = array<i64: 8, 192>}, {pipeline_mode = #tpu.pipeline_mode<synchronous>, transform_indices = @transform_1, window_bounds = array<i64: 192, 32>}, {transform_indices = @transform_2, window_bounds = array<i64: 8, 32>}]} {
    %c0 = arith.constant 0 : index
    %c0_0 = arith.constant 0 : index
    %0 = vector.load %arg1[%c0, %c0_0] : memref<8x192xf32, #tpu.memory_space<vmem>>, vector<8x192xf32>
    %1 = arith.truncf %0 : vector<8x192xf32> to vector<8x192xbf16>
    %c0_1 = arith.constant 0 : index
    %c0_2 = arith.constant 0 : index
    %2 = vector.load %arg2[%c0_1, %c0_2] : memref<192x32xbf16, #tpu.memory_space<vmem>>, vector<192x32xbf16>
    %cst = arith.constant dense<0.000000e+00> : vector<8x32xf32>
    %3 = tpu.matmul %1, %2, %cst {dimension_numbers = #tpu.dot_dimension_numbers<[1], [0], [0], [1], [0, 0, 1, 1], [], []>} : vector<8x192xbf16>, vector<192x32xbf16>, vector<8x32xf32> -> vector<8x32xf32>
    %c0_3 = arith.constant 0 : index
    %c0_4 = arith.constant 0 : index
    %4 = vector.load %arg3[%c0_3, %c0_4] : memref<8x32xf32, #tpu.memory_space<vmem>>, vector<8x32xf32>
    tpu.vector_store %arg3[%c0_3, %c0_4], %3 {strides = array<i32>} : memref<8x32xf32, #tpu.memory_space<vmem>>, vector<8x32xf32>,
    return
  }
  func.func @transform_0(%arg0: i32) -> (i32, i32) {
    %c0_i32 = arith.constant 0 : i32
    %c0_i32_0 = arith.constant 0 : i32
    return %arg0, %c0_i32 : i32, i32
  }
  func.func @transform_1(%arg0: i32) -> (i32, i32) {
    %c0_i32 = arith.constant 0 : i32
    %c0_i32_0 = arith.constant 0 : i32
    %c0_i32_1 = arith.constant 0 : i32
    return %c0_i32, %c0_i32_0 : i32, i32
  }
  func.func @transform_2(%arg0: i32) -> (i32, i32) {
    %c0_i32 = arith.constant 0 : i32
    %c0_i32_0 = arith.constant 0 : i32
    return %arg0, %c0_i32 : i32, i32
  }
}

module attributes {stable_mosaic.version = 11 : i64} {
  func.func @_layernorm_kernel(%arg0: i32, %arg1: memref<16x32xf32, #tpu.memory_space<vmem>>, %arg2: memref<1x32xf32, #tpu.memory_space<vmem>>, %arg3: memref<1x32xf32, #tpu.memory_space<vmem>>, %arg4: memref<16x32xf32, #tpu.memory_space<vmem>>) attributes {dimension_semantics = [#tpu.dimension_semantics<parallel>], iteration_bounds = array<i64: 1>, scalar_prefetch = 0 : i64, scratch_operands = 0 : i64, tpu.core_type = #tpu.core_type<tc>, window_params = [{transform_indices = @transform_0, window_bounds = array<i64: 16, 32>}, {pipeline_mode = #tpu.pipeline_mode<synchronous>, transform_indices = @transform_1, window_bounds = array<i64: 1, 32>}, {pipeline_mode = #tpu.pipeline_mode<synchronous>, transform_indices = @transform_2, window_bounds = array<i64: 1, 32>}, {transform_indices = @transform_3, window_bounds = array<i64: 16, 32>}]} {
    %c0 = arith.constant 0 : index
    %c0_0 = arith.constant 0 : index
    %0 = vector.load %arg1[%c0, %c0_0] : memref<16x32xf32, #tpu.memory_space<vmem>>, vector<16x32xf32>
    %cst = arith.constant dense<0.000000e+00> : vector<16xf32>
    %1 = vector.multi_reduction <add>, %0, %cst [1] : vector<16x32xf32> to vector<16xf32>
    %2 = vector.shape_cast %1 : vector<16xf32> to vector<16x1xf32>
    %cst_1 = arith.constant 3.200000e+01 : f32
    %3 = vector.broadcast %cst_1 : f32 to vector<16x1xf32>
    %4 = arith.divf %2, %3 : vector<16x1xf32>
    %5 = vector.broadcast %4 : vector<16x1xf32> to vector<16x32xf32>
    %6 = arith.subf %0, %5 : vector<16x32xf32>
    %7 = arith.mulf %6, %6 : vector<16x32xf32>
    %cst_2 = arith.constant dense<0.000000e+00> : vector<16xf32>
    %8 = vector.multi_reduction <add>, %7, %cst_2 [1] : vector<16x32xf32> to vector<16xf32>
    %9 = vector.shape_cast %8 : vector<16xf32> to vector<16x1xf32>
    %cst_3 = arith.constant 3.200000e+01 : f32
    %10 = vector.broadcast %cst_3 : f32 to vector<16x1xf32>
    %11 = arith.divf %9, %10 : vector<16x1xf32>
    %cst_4 = arith.constant 9.99999974E-6 : f32
    %12 = vector.broadcast %cst_4 : f32 to vector<16x1xf32>
    %13 = arith.addf %11, %12 : vector<16x1xf32>
    %14 = math.rsqrt %13 : vector<16x1xf32>
    %15 = vector.broadcast %14 : vector<16x1xf32> to vector<16x32xf32>
    %16 = arith.mulf %6, %15 : vector<16x32xf32>
    %c0_5 = arith.constant 0 : index
    %c0_6 = arith.constant 0 : index
    %17 = vector.load %arg2[%c0_5, %c0_6] : memref<1x32xf32, #tpu.memory_space<vmem>>, vector<1x32xf32>
    %18 = vector.broadcast %17 : vector<1x32xf32> to vector<16x32xf32>
    %19 = arith.mulf %16, %18 : vector<16x32xf32>
    %c0_7 = arith.constant 0 : index
    %c0_8 = arith.constant 0 : index
    %20 = vector.load %arg3[%c0_7, %c0_8] : memref<1x32xf32, #tpu.memory_space<vmem>>, vector<1x32xf32>
    %21 = vector.broadcast %20 : vector<1x32xf32> to vector<16x32xf32>
    %22 = arith.addf %19, %21 : vector<16x32xf32>
    %c0_9 = arith.constant 0 : index
    %c0_10 = arith.constant 0 : index
    %23 = vector.load %arg4[%c0_9, %c0_10] : memref<16x32xf32, #tpu.memory_space<vmem>>, vector<16x32xf32>
    tpu.vector_store %arg4[%c0_9, %c0_10], %22 {strides = array<i32>} : memref<16x32xf32, #tpu.memory_space<vmem>>, vector<16x32xf32>,
    return
  }
  func.func @transform_0(%arg0: i32) -> (i32, i32) {
    %c0_i32 = arith.constant 0 : i32
    %c0_i32_0 = arith.constant 0 : i32
    return %arg0, %c0_i32 : i32, i32
  }
  func.func @transform_1(%arg0: i32) -> (i32, i32) {
    %c0_i32 = arith.constant 0 : i32
    %c0_i32_0 = arith.constant 0 : i32
    %c0_i32_1 = arith.constant 0 : i32
    return %c0_i32, %c0_i32_0 : i32, i32
  }
  func.func @transform_2(%arg0: i32) -> (i32, i32) {
    %c0_i32 = arith.constant 0 : i32
    %c0_i32_0 = arith.constant 0 : i32
    %c0_i32_1 = arith.constant 0 : i32
    return %c0_i32, %c0_i32_0 : i32, i32
  }
  func.func @transform_3(%arg0: i32) -> (i32, i32) {
    %c0_i32 = arith.constant 0 : i32
    %c0_i32_0 = arith.constant 0 : i32
    return %arg0, %c0_i32 : i32, i32
  }
}

module attributes {stable_mosaic.version = 11 : i64} {
  func.func @_ln_mm_kernel(%arg0: i32, %arg1: memref<16x32xf32, #tpu.memory_space<vmem>>, %arg2: memref<1x32xf32, #tpu.memory_space<vmem>>, %arg3: memref<1x32xf32, #tpu.memory_space<vmem>>, %arg4: memref<32x96xbf16, #tpu.memory_space<vmem>>, %arg5: memref<1x96xf32, #tpu.memory_space<vmem>>, %arg6: memref<16x96xbf16, #tpu.memory_space<vmem>>) attributes {dimension_semantics = [#tpu.dimension_semantics<parallel>], iteration_bounds = array<i64: 1>, scalar_prefetch = 0 : i64, scratch_operands = 0 : i64, tpu.core_type = #tpu.core_type<tc>, window_params = [{transform_indices = @transform_0, window_bounds = array<i64: 16, 32>}, {pipeline_mode = #tpu.pipeline_mode<synchronous>, transform_indices = @transform_1, window_bounds = array<i64: 1, 32>}, {pipeline_mode = #tpu.pipeline_mode<synchronous>, transform_indices = @transform_2, window_bounds = array<i64: 1, 32>}, {pipeline_mode = #tpu.pipeline_mode<synchronous>, transform_indices = @transform_3, window_bounds = array<i64: 32, 96>}, {pipeline_mode = #tpu.pipeline_mode<synchronous>, transform_indices = @transform_4, window_bounds = array<i64: 1, 96>}, {transform_indices = @transform_5, window_bounds = array<i64: 16, 96>}]} {
    %c0 = arith.constant 0 : index
    %c0_0 = arith.constant 0 : index
    %0 = vector.load %arg1[%c0, %c0_0] : memref<16x32xf32, #tpu.memory_space<vmem>>, vector<16x32xf32>
    %cst = arith.constant dense<0.000000e+00> : vector<16xf32>
    %1 = vector.multi_reduction <add>, %0, %cst [1] : vector<16x32xf32> to vector<16xf32>
    %2 = vector.shape_cast %1 : vector<16xf32> to vector<16x1xf32>
    %cst_1 = arith.constant 3.200000e+01 : f32
    %3 = vector.broadcast %cst_1 : f32 to vector<16x1xf32>
    %4 = arith.divf %2, %3 : vector<16x1xf32>
    %5 = vector.broadcast %4 : vector<16x1xf32> to vector<16x32xf32>
    %6 = arith.subf %0, %5 : vector<16x32xf32>
    %7 = arith.mulf %6, %6 : vector<16x32xf32>
    %cst_2 = arith.constant dense<0.000000e+00> : vector<16xf32>
    %8 = vector.multi_reduction <add>, %7, %cst_2 [1] : vector<16x32xf32> to vector<16xf32>
    %9 = vector.shape_cast %8 : vector<16xf32> to vector<16x1xf32>
    %cst_3 = arith.constant 3.200000e+01 : f32
    %10 = vector.broadcast %cst_3 : f32 to vector<16x1xf32>
    %11 = arith.divf %9, %10 : vector<16x1xf32>
    %cst_4 = arith.constant 9.99999974E-6 : f32
    %12 = vector.broadcast %cst_4 : f32 to vector<16x1xf32>
    %13 = arith.addf %11, %12 : vector<16x1xf32>
    %14 = math.rsqrt %13 : vector<16x1xf32>
    %15 = vector.broadcast %14 : vector<16x1xf32> to vector<16x32xf32>
    %16 = arith.mulf %6, %15 : vector<16x32xf32>
    %c0_5 = arith.constant 0 : index
    %c0_6 = arith.constant 0 : index
    %17 = vector.load %arg2[%c0_5, %c0_6] : memref<1x32xf32, #tpu.memory_space<vmem>>, vector<1x32xf32>
    %18 = vector.broadcast %17 : vector<1x32xf32> to vector<16x32xf32>
    %19 = arith.mulf %16, %18 : vector<16x32xf32>
    %c0_7 = arith.constant 0 : index
    %c0_8 = arith.constant 0 : index
    %20 = vector.load %arg3[%c0_7, %c0_8] : memref<1x32xf32, #tpu.memory_space<vmem>>, vector<1x32xf32>
    %21 = vector.broadcast %20 : vector<1x32xf32> to vector<16x32xf32>
    %22 = arith.addf %19, %21 : vector<16x32xf32>
    %23 = arith.truncf %22 : vector<16x32xf32> to vector<16x32xbf16>
    %c0_9 = arith.constant 0 : index
    %c0_10 = arith.constant 0 : index
    %24 = vector.load %arg4[%c0_9, %c0_10] : memref<32x96xbf16, #tpu.memory_space<vmem>>, vector<32x96xbf16>
    %cst_11 = arith.constant dense<0.000000e+00> : vector<16x96xf32>
    %25 = tpu.matmul %23, %24, %cst_11 {dimension_numbers = #tpu.dot_dimension_numbers<[1], [0], [0], [1], [0, 0, 1, 1], [], []>} : vector<16x32xbf16>, vector<32x96xbf16>, vector<16x96xf32> -> vector<16x96xf32>
    %c0_12 = arith.constant 0 : index
    %c0_13 = arith.constant 0 : index
    %26 = vector.load %arg5[%c0_12, %c0_13] : memref<1x96xf32, #tpu.memory_space<vmem>>, vector<1x96xf32>
    %27 = vector.broadcast %26 : vector<1x96xf32> to vector<16x96xf32>
    %28 = arith.addf %25, %27 : vector<16x96xf32>
    %29 = arith.truncf %28 : vector<16x96xf32> to vector<16x96xbf16>
    %c0_14 = arith.constant 0 : index
    %c0_15 = arith.constant 0 : index
    %30 = vector.load %arg6[%c0_14, %c0_15] : memref<16x96xbf16, #tpu.memory_space<vmem>>, vector<16x96xbf16>
    tpu.vector_store %arg6[%c0_14, %c0_15], %29 {strides = array<i32>} : memref<16x96xbf16, #tpu.memory_space<vmem>>, vector<16x96xbf16>,
    return
  }
  func.func @transform_0(%arg0: i32) -> (i32, i32) {
    %c0_i32 = arith.constant 0 : i32
    %c0_i32_0 = arith.constant 0 : i32
    return %arg0, %c0_i32 : i32, i32
  }
  func.func @transform_1(%arg0: i32) -> (i32, i32) {
    %c0_i32 = arith.constant 0 : i32
    %c0_i32_0 = arith.constant 0 : i32
    %c0_i32_1 = arith.constant 0 : i32
    return %c0_i32, %c0_i32_0 : i32, i32
  }
  func.func @transform_2(%arg0: i32) -> (i32, i32) {
    %c0_i32 = arith.constant 0 : i32
    %c0_i32_0 = arith.constant 0 : i32
    %c0_i32_1 = arith.constant 0 : i32
    return %c0_i32, %c0_i32_0 : i32, i32
  }
  func.func @transform_3(%arg0: i32) -> (i32, i32) {
    %c0_i32 = arith.constant 0 : i32
    %c0_i32_0 = arith.constant 0 : i32
    %c0_i32_1 = arith.constant 0 : i32
    return %c0_i32, %c0_i32_0 : i32, i32
  }
  func.func @transform_4(%arg0: i32) -> (i32, i32) {
    %c0_i32 = arith.constant 0 : i32
    %c0_i32_0 = arith.constant 0 : i32
    %c0_i32_1 = arith.constant 0 : i32
    return %c0_i32, %c0_i32_0 : i32, i32
  }
  func.func @transform_5(%arg0: i32) -> (i32, i32) {
    %c0_i32 = arith.constant 0 : i32
    %c0_i32_0 = arith.constant 0 : i32
    return %arg0, %c0_i32 : i32, i32
  }
}

module attributes {stable_mosaic.version = 11 : i64} {
  func.func @_attention_kernel(%arg0: i32, %arg1: memref<1x8x96xbf16, #tpu.memory_space<vmem>>, %arg2: memref<1x8x32xbf16, #tpu.memory_space<vmem>>) attributes {dimension_semantics = [#tpu.dimension_semantics<parallel>], iteration_bounds = array<i64: 2>, scalar_prefetch = 0 : i64, scratch_operands = 0 : i64, tpu.core_type = #tpu.core_type<tc>, window_params = [{transform_indices = @transform_0, window_bounds = array<i64: 1, 8, 96>}, {transform_indices = @transform_1, window_bounds = array<i64: 1, 8, 32>}]} {
    %0 = tpu.iota {dimensions = array<i32: 1>} : vector<1x8xi32>
    %c5_i32 = arith.constant 5 : i32
    %1 = vector.broadcast %c5_i32 : i32 to vector<1x8xi32>
    %2 = arith.cmpi slt, %0, %1 : vector<1x8xi32>
    %cst = arith.constant 0.000000e+00 : f32
    %cst_0 = arith.constant -1.000000e+30 : f32
    %3 = vector.broadcast %cst : f32 to vector<1x8xf32>
    %4 = vector.broadcast %cst_0 : f32 to vector<1x8xf32>
    %5 = arith.select %2, %3, %4 : vector<1x8xi1>, vector<1x8xf32>
    %c0 = arith.constant 0 : index
    %c0_1 = arith.constant 0 : index
    %c0_2 = arith.constant 0 : index
    %6 = vector.load %arg1[%c0, %c0_1, %c0_2] : memref<1x8x96xbf16, #tpu.memory_space<vmem>>, vector<1x8x8xbf16>
    %7 = vector.shape_cast %6 : vector<1x8x8xbf16> to vector<8x8xbf16>
    %c0_3 = arith.constant 0 : index
    %c0_4 = arith.constant 0 : index
    %c32 = arith.constant 32 : index
    %8 = vector.load %arg1[%c0_3, %c0_4, %c32] : memref<1x8x96xbf16, #tpu.memory_space<vmem>>, vector<1x8x8xbf16>
    %9 = vector.shape_cast %8 : vector<1x8x8xbf16> to vector<8x8xbf16>
    %c0_5 = arith.constant 0 : index
    %c0_6 = arith.constant 0 : index
    %c64 = arith.constant 64 : index
    %10 = vector.load %arg1[%c0_5, %c0_6, %c64] : memref<1x8x96xbf16, #tpu.memory_space<vmem>>, vector<1x8x8xbf16>
    %11 = vector.shape_cast %10 : vector<1x8x8xbf16> to vector<8x8xbf16>
    %cst_7 = arith.constant dense<0.000000e+00> : vector<8x8xf32>
    %12 = tpu.matmul %7, %9, %cst_7 {dimension_numbers = #tpu.dot_dimension_numbers<[1], [1], [0], [0], [0, 0, 1, 0], [], []>} : vector<8x8xbf16>, vector<8x8xbf16>, vector<8x8xf32> -> vector<8x8xf32>
    %13 = vector.broadcast %5 : vector<1x8xf32> to vector<8x8xf32>
    %14 = arith.addf %12, %13 : vector<8x8xf32>
    %cst_8 = arith.constant dense<0xFF800000> : vector<8xf32>
    %15 = vector.multi_reduction <maximumf>, %14, %cst_8 [1] : vector<8x8xf32> to vector<8xf32>
    %16 = vector.shape_cast %15 : vector<8xf32> to vector<8x1xf32>
    %17 = vector.broadcast %16 : vector<8x1xf32> to vector<8x8xf32>
    %18 = arith.subf %14, %17 : vector<8x8xf32>
    %19 = math.exp %18 : vector<8x8xf32>
    %cst_9 = arith.constant dense<0.000000e+00> : vector<8xf32>
    %20 = vector.multi_reduction <add>, %19, %cst_9 [1] : vector<8x8xf32> to vector<8xf32>
    %21 = vector.shape_cast %20 : vector<8xf32> to vector<8x1xf32>
    %22 = arith.truncf %19 : vector<8x8xf32> to vector<8x8xbf16>
    %cst_10 = arith.constant dense<0.000000e+00> : vector<8x8xf32>
    %23 = tpu.matmul %22, %11, %cst_10 {dimension_numbers = #tpu.dot_dimension_numbers<[1], [0], [0], [1], [0, 0, 1, 1], [], []>} : vector<8x8xbf16>, vector<8x8xbf16>, vector<8x8xf32> -> vector<8x8xf32>
    %24 = tpu.reciprocal %21 : vector<8x1xf32> -> vector<8x1xf32>
    %25 = vector.broadcast %24 : vector<8x1xf32> to vector<8x8xf32>
    %26 = arith.mulf %23, %25 : vector<8x8xf32>
    %c0_11 = arith.constant 0 : index
    %c0_12 = arith.constant 0 : index
    %c8 = arith.constant 8 : index
    %27 = vector.load %arg1[%c0_11, %c0_12, %c8] : memref<1x8x96xbf16, #tpu.memory_space<vmem>>, vector<1x8x8xbf16>
    %28 = vector.shape_cast %27 : vector<1x8x8xbf16> to vector<8x8xbf16>
    %c0_13 = arith.constant 0 : index
    %c0_14 = arith.constant 0 : index
    %c40 = arith.constant 40 : index
    %29 = vector.load %arg1[%c0_13, %c0_14, %c40] : memref<1x8x96xbf16, #tpu.memory_space<vmem>>, vector<1x8x8xbf16>
    %30 = vector.shape_cast %29 : vector<1x8x8xbf16> to vector<8x8xbf16>
    %c0_15 = arith.constant 0 : index
    %c0_16 = arith.constant 0 : index
    %c72 = arith.constant 72 : index
    %31 = vector.load %arg1[%c0_15, %c0_16, %c72] : memref<1x8x96xbf16, #tpu.memory_space<vmem>>, vector<1x8x8xbf16>
    %32 = vector.shape_cast %31 : vector<1x8x8xbf16> to vector<8x8xbf16>
    %cst_17 = arith.constant dense<0.000000e+00> : vector<8x8xf32>
    %33 = tpu.matmul %28, %30, %cst_17 {dimension_numbers = #tpu.dot_dimension_numbers<[1], [1], [0], [0], [0, 0, 1, 0], [], []>} : vector<8x8xbf16>, vector<8x8xbf16>, vector<8x8xf32> -> vector<8x8xf32>
    %34 = vector.broadcast %5 : vector<1x8xf32> to vector<8x8xf32>
    %35 = arith.addf %33, %34 : vector<8x8xf32>
    %cst_18 = arith.constant dense<0xFF800000> : vector<8xf32>
    %36 = vector.multi_reduction <maximumf>, %35, %cst_18 [1] : vector<8x8xf32> to vector<8xf32>
    %37 = vector.shape_cast %36 : vector<8xf32> to vector<8x1xf32>
    %38 = vector.broadcast %37 : vector<8x1xf32> to vector<8x8xf32>
    %39 = arith.subf %35, %38 : vector<8x8xf32>
    %40 = math.exp %39 : vector<8x8xf32>
    %cst_19 = arith.constant dense<0.000000e+00> : vector<8xf32>
    %41 = vector.multi_reduction <add>, %40, %cst_19 [1] : vector<8x8xf32> to vector<8xf32>
    %42 = vector.shape_cast %41 : vector<8xf32> to vector<8x1xf32>
    %43 = arith.truncf %40 : vector<8x8xf32> to vector<8x8xbf16>
    %cst_20 = arith.constant dense<0.000000e+00> : vector<8x8xf32>
    %44 = tpu.matmul %43, %32, %cst_20 {dimension_numbers = #tpu.dot_dimension_numbers<[1], [0], [0], [1], [0, 0, 1, 1], [], []>} : vector<8x8xbf16>, vector<8x8xbf16>, vector<8x8xf32> -> vector<8x8xf32>
    %45 = tpu.reciprocal %42 : vector<8x1xf32> -> vector<8x1xf32>
    %46 = vector.broadcast %45 : vector<8x1xf32> to vector<8x8xf32>
    %47 = arith.mulf %44, %46 : vector<8x8xf32>
    %c0_21 = arith.constant 0 : index
    %c0_22 = arith.constant 0 : index
    %c16 = arith.constant 16 : index
    %48 = vector.load %arg1[%c0_21, %c0_22, %c16] : memref<1x8x96xbf16, #tpu.memory_space<vmem>>, vector<1x8x8xbf16>
    %49 = vector.shape_cast %48 : vector<1x8x8xbf16> to vector<8x8xbf16>
    %c0_23 = arith.constant 0 : index
    %c0_24 = arith.constant 0 : index
    %c48 = arith.constant 48 : index
    %50 = vector.load %arg1[%c0_23, %c0_24, %c48] : memref<1x8x96xbf16, #tpu.memory_space<vmem>>, vector<1x8x8xbf16>
    %51 = vector.shape_cast %50 : vector<1x8x8xbf16> to vector<8x8xbf16>
    %c0_25 = arith.constant 0 : index
    %c0_26 = arith.constant 0 : index
    %c80 = arith.constant 80 : index
    %52 = vector.load %arg1[%c0_25, %c0_26, %c80] : memref<1x8x96xbf16, #tpu.memory_space<vmem>>, vector<1x8x8xbf16>
    %53 = vector.shape_cast %52 : vector<1x8x8xbf16> to vector<8x8xbf16>
    %cst_27 = arith.constant dense<0.000000e+00> : vector<8x8xf32>
    %54 = tpu.matmul %49, %51, %cst_27 {dimension_numbers = #tpu.dot_dimension_numbers<[1], [1], [0], [0], [0, 0, 1, 0], [], []>} : vector<8x8xbf16>, vector<8x8xbf16>, vector<8x8xf32> -> vector<8x8xf32>
    %55 = vector.broadcast %5 : vector<1x8xf32> to vector<8x8xf32>
    %56 = arith.addf %54, %55 : vector<8x8xf32>
    %cst_28 = arith.constant dense<0xFF800000> : vector<8xf32>
    %57 = vector.multi_reduction <maximumf>, %56, %cst_28 [1] : vector<8x8xf32> to vector<8xf32>
    %58 = vector.shape_cast %57 : vector<8xf32> to vector<8x1xf32>
    %59 = vector.broadcast %58 : vector<8x1xf32> to vector<8x8xf32>
    %60 = arith.subf %56, %59 : vector<8x8xf32>
    %61 = math.exp %60 : vector<8x8xf32>
    %cst_29 = arith.constant dense<0.000000e+00> : vector<8xf32>
    %62 = vector.multi_reduction <add>, %61, %cst_29 [1] : vector<8x8xf32> to vector<8xf32>
    %63 = vector.shape_cast %62 : vector<8xf32> to vector<8x1xf32>
    %64 = arith.truncf %61 : vector<8x8xf32> to vector<8x8xbf16>
    %cst_30 = arith.constant dense<0.000000e+00> : vector<8x8xf32>
    %65 = tpu.matmul %64, %53, %cst_30 {dimension_numbers = #tpu.dot_dimension_numbers<[1], [0], [0], [1], [0, 0, 1, 1], [], []>} : vector<8x8xbf16>, vector<8x8xbf16>, vector<8x8xf32> -> vector<8x8xf32>
    %66 = tpu.reciprocal %63 : vector<8x1xf32> -> vector<8x1xf32>
    %67 = vector.broadcast %66 : vector<8x1xf32> to vector<8x8xf32>
    %68 = arith.mulf %65, %67 : vector<8x8xf32>
    %c0_31 = arith.constant 0 : index
    %c0_32 = arith.constant 0 : index
    %c24 = arith.constant 24 : index
    %69 = vector.load %arg1[%c0_31, %c0_32, %c24] : memref<1x8x96xbf16, #tpu.memory_space<vmem>>, vector<1x8x8xbf16>
    %70 = vector.shape_cast %69 : vector<1x8x8xbf16> to vector<8x8xbf16>
    %c0_33 = arith.constant 0 : index
    %c0_34 = arith.constant 0 : index
    %c56 = arith.constant 56 : index
    %71 = vector.load %arg1[%c0_33, %c0_34, %c56] : memref<1x8x96xbf16, #tpu.memory_space<vmem>>, vector<1x8x8xbf16>
    %72 = vector.shape_cast %71 : vector<1x8x8xbf16> to vector<8x8xbf16>
    %c0_35 = arith.constant 0 : index
    %c0_36 = arith.constant 0 : index
    %c88 = arith.constant 88 : index
    %73 = vector.load %arg1[%c0_35, %c0_36, %c88] : memref<1x8x96xbf16, #tpu.memory_space<vmem>>, vector<1x8x8xbf16>
    %74 = vector.shape_cast %73 : vector<1x8x8xbf16> to vector<8x8xbf16>
    %cst_37 = arith.constant dense<0.000000e+00> : vector<8x8xf32>
    %75 = tpu.matmul %70, %72, %cst_37 {dimension_numbers = #tpu.dot_dimension_numbers<[1], [1], [0], [0], [0, 0, 1, 0], [], []>} : vector<8x8xbf16>, vector<8x8xbf16>, vector<8x8xf32> -> vector<8x8xf32>
    %76 = vector.broadcast %5 : vector<1x8xf32> to vector<8x8xf32>
    %77 = arith.addf %75, %76 : vector<8x8xf32>
    %cst_38 = arith.constant dense<0xFF800000> : vector<8xf32>
    %78 = vector.multi_reduction <maximumf>, %77, %cst_38 [1] : vector<8x8xf32> to vector<8xf32>
    %79 = vector.shape_cast %78 : vector<8xf32> to vector<8x1xf32>
    %80 = vector.broadcast %79 : vector<8x1xf32> to vector<8x8xf32>
    %81 = arith.subf %77, %80 : vector<8x8xf32>
    %82 = math.exp %81 : vector<8x8xf32>
    %cst_39 = arith.constant dense<0.000000e+00> : vector<8xf32>
    %83 = vector.multi_reduction <add>, %82, %cst_39 [1] : vector<8x8xf32> to vector<8xf32>
    %84 = vector.shape_cast %83 : vector<8xf32> to vector<8x1xf32>
    %85 = arith.truncf %82 : vector<8x8xf32> to vector<8x8xbf16>
    %cst_40 = arith.constant dense<0.000000e+00> : vector<8x8xf32>
    %86 = tpu.matmul %85, %74, %cst_40 {dimension_numbers = #tpu.dot_dimension_numbers<[1], [0], [0], [1], [0, 0, 1, 1], [], []>} : vector<8x8xbf16>, vector<8x8xbf16>, vector<8x8xf32> -> vector<8x8xf32>
    %87 = tpu.reciprocal %84 : vector<8x1xf32> -> vector<8x1xf32>
    %88 = vector.broadcast %87 : vector<8x1xf32> to vector<8x8xf32>
    %89 = arith.mulf %86, %88 : vector<8x8xf32>
    %90 = tpu.concatenate %26, %47, %68, %89 in 1 : vector<8x8xf32>, vector<8x8xf32>, vector<8x8xf32>, vector<8x8xf32> -> vector<8x32xf32>
    %91 = arith.truncf %90 : vector<8x32xf32> to vector<8x32xbf16>
    %c0_41 = arith.constant 0 : index
    %c0_42 = arith.constant 0 : index
    %c0_43 = arith.constant 0 : index
    %92 = vector.load %arg2[%c0_41, %c0_42, %c0_43] : memref<1x8x32xbf16, #tpu.memory_space<vmem>>, vector<1x8x32xbf16>
    %93 = vector.shape_cast %92 : vector<1x8x32xbf16> to vector<8x32xbf16>
    %94 = vector.shape_cast %91 : vector<8x32xbf16> to vector<1x8x32xbf16>
    tpu.vector_store %arg2[%c0_41, %c0_42, %c0_43], %94 {strides = array<i32>} : memref<1x8x32xbf16, #tpu.memory_space<vmem>>, vector<1x8x32xbf16>,
    return
  }
  func.func @transform_0(%arg0: i32) -> (i32, i32, i32) {
    %c0_i32 = arith.constant 0 : i32
    %c0_i32_0 = arith.constant 0 : i32
    %c0_i32_1 = arith.constant 0 : i32
    return %arg0, %c0_i32, %c0_i32_0 : i32, i32, i32
  }
  func.func @transform_1(%arg0: i32) -> (i32, i32, i32) {
    %c0_i32 = arith.constant 0 : i32
    %c0_i32_0 = arith.constant 0 : i32
    %c0_i32_1 = arith.constant 0 : i32
    return %arg0, %c0_i32, %c0_i32_0 : i32, i32, i32
  }
}

module attributes {stable_mosaic.version = 11 : i64} {
  func.func @_mm_kernel(%arg0: i32, %arg1: memref<16x32xbf16, #tpu.memory_space<vmem>>, %arg2: memref<32x32xbf16, #tpu.memory_space<vmem>>, %arg3: memref<1x32xf32, #tpu.memory_space<vmem>>, %arg4: memref<16x32xf32, #tpu.memory_space<vmem>>, %arg5: memref<16x32xf32, #tpu.memory_space<vmem>>) attributes {dimension_semantics = [#tpu.dimension_semantics<parallel>], iteration_bounds = array<i64: 1>, scalar_prefetch = 0 : i64, scratch_operands = 0 : i64, tpu.core_type = #tpu.core_type<tc>, window_params = [{transform_indices = @transform_0, window_bounds = array<i64: 16, 32>}, {pipeline_mode = #tpu.pipeline_mode<synchronous>, transform_indices = @transform_1, window_bounds = array<i64: 32, 32>}, {pipeline_mode = #tpu.pipeline_mode<synchronous>, transform_indices = @transform_2, window_bounds = array<i64: 1, 32>}, {transform_indices = @transform_3, window_bounds = array<i64: 16, 32>}, {transform_indices = @transform_4, window_bounds = array<i64: 16, 32>}]} {
    %c0 = arith.constant 0 : index
    %c0_0 = arith.constant 0 : index
    %0 = vector.load %arg1[%c0, %c0_0] : memref<16x32xbf16, #tpu.memory_space<vmem>>, vector<16x32xbf16>
    %c0_1 = arith.constant 0 : index
    %c0_2 = arith.constant 0 : index
    %1 = vector.load %arg2[%c0_1, %c0_2] : memref<32x32xbf16, #tpu.memory_space<vmem>>, vector<32x32xbf16>
    %cst = arith.constant dense<0.000000e+00> : vector<16x32xf32>
    %2 = tpu.matmul %0, %1, %cst {dimension_numbers = #tpu.dot_dimension_numbers<[1], [0], [0], [1], [0, 0, 1, 1], [], []>} : vector<16x32xbf16>, vector<32x32xbf16>, vector<16x32xf32> -> vector<16x32xf32>
    %c0_3 = arith.constant 0 : index
    %c0_4 = arith.constant 0 : index
    %3 = vector.load %arg3[%c0_3, %c0_4] : memref<1x32xf32, #tpu.memory_space<vmem>>, vector<1x32xf32>
    %4 = vector.broadcast %3 : vector<1x32xf32> to vector<16x32xf32>
    %5 = arith.addf %2, %4 : vector<16x32xf32>
    %c0_5 = arith.constant 0 : index
    %c0_6 = arith.constant 0 : index
    %6 = vector.load %arg4[%c0_5, %c0_6] : memref<16x32xf32, #tpu.memory_space<vmem>>, vector<16x32xf32>
    %7 = arith.addf %5, %6 : vector<16x32xf32>
    %c0_7 = arith.constant 0 : index
    %c0_8 = arith.constant 0 : index
    %8 = vector.load %arg5[%c0_7, %c0_8] : memref<16x32xf32, #tpu.memory_space<vmem>>, vector<16x32xf32>
    tpu.vector_store %arg5[%c0_7, %c0_8], %7 {strides = array<i32>} : memref<16x32xf32, #tpu.memory_space<vmem>>, vector<16x32xf32>,
    return
  }
  func.func @transform_0(%arg0: i32) -> (i32, i32) {
    %c0_i32 = arith.constant 0 : i32
    %c0_i32_0 = arith.constant 0 : i32
    return %arg0, %c0_i32 : i32, i32
  }
  func.func @transform_1(%arg0: i32) -> (i32, i32) {
    %c0_i32 = arith.constant 0 : i32
    %c0_i32_0 = arith.constant 0 : i32
    %c0_i32_1 = arith.constant 0 : i32
    return %c0_i32, %c0_i32_0 : i32, i32
  }
  func.func @transform_2(%arg0: i32) -> (i32, i32) {
    %c0_i32 = arith.constant 0 : i32
    %c0_i32_0 = arith.constant 0 : i32
    %c0_i32_1 = arith.constant 0 : i32
    return %c0_i32, %c0_i32_0 : i32, i32
  }
  func.func @transform_3(%arg0: i32) -> (i32, i32) {
    %c0_i32 = arith.constant 0 : i32
    %c0_i32_0 = arith.constant 0 : i32
    return %arg0, %c0_i32 : i32, i32
  }
  func.func @transform_4(%arg0: i32) -> (i32, i32) {
    %c0_i32 = arith.constant 0 : i32
    %c0_i32_0 = arith.constant 0 : i32
    return %arg0, %c0_i32 : i32, i32
  }
}

module attributes {stable_mosaic.version = 11 : i64} {
  func.func @_ln_mm_kernel(%arg0: i32, %arg1: memref<16x32xf32, #tpu.memory_space<vmem>>, %arg2: memref<1x32xf32, #tpu.memory_space<vmem>>, %arg3: memref<1x32xf32, #tpu.memory_space<vmem>>, %arg4: memref<32x128xbf16, #tpu.memory_space<vmem>>, %arg5: memref<1x128xf32, #tpu.memory_space<vmem>>, %arg6: memref<16x128xbf16, #tpu.memory_space<vmem>>) attributes {dimension_semantics = [#tpu.dimension_semantics<parallel>], iteration_bounds = array<i64: 1>, scalar_prefetch = 0 : i64, scratch_operands = 0 : i64, tpu.core_type = #tpu.core_type<tc>, window_params = [{transform_indices = @transform_0, window_bounds = array<i64: 16, 32>}, {pipeline_mode = #tpu.pipeline_mode<synchronous>, transform_indices = @transform_1, window_bounds = array<i64: 1, 32>}, {pipeline_mode = #tpu.pipeline_mode<synchronous>, transform_indices = @transform_2, window_bounds = array<i64: 1, 32>}, {pipeline_mode = #tpu.pipeline_mode<synchronous>, transform_indices = @transform_3, window_bounds = array<i64: 32, 128>}, {pipeline_mode = #tpu.pipeline_mode<synchronous>, transform_indices = @transform_4, window_bounds = array<i64: 1, 128>}, {transform_indices = @transform_5, window_bounds = array<i64: 16, 128>}]} {
    %c0 = arith.constant 0 : index
    %c0_0 = arith.constant 0 : index
    %0 = vector.load %arg1[%c0, %c0_0] : memref<16x32xf32, #tpu.memory_space<vmem>>, vector<16x32xf32>
    %cst = arith.constant dense<0.000000e+00> : vector<16xf32>
    %1 = vector.multi_reduction <add>, %0, %cst [1] : vector<16x32xf32> to vector<16xf32>
    %2 = vector.shape_cast %1 : vector<16xf32> to vector<16x1xf32>
    %cst_1 = arith.constant 3.200000e+01 : f32
    %3 = vector.broadcast %cst_1 : f32 to vector<16x1xf32>
    %4 = arith.divf %2, %3 : vector<16x1xf32>
    %5 = vector.broadcast %4 : vector<16x1xf32> to vector<16x32xf32>
    %6 = arith.subf %0, %5 : vector<16x32xf32>
    %7 = arith.mulf %6, %6 : vector<16x32xf32>
    %cst_2 = arith.constant dense<0.000000e+00> : vector<16xf32>
    %8 = vector.multi_reduction <add>, %7, %cst_2 [1] : vector<16x32xf32> to vector<16xf32>
    %9 = vector.shape_cast %8 : vector<16xf32> to vector<16x1xf32>
    %cst_3 = arith.constant 3.200000e+01 : f32
    %10 = vector.broadcast %cst_3 : f32 to vector<16x1xf32>
    %11 = arith.divf %9, %10 : vector<16x1xf32>
    %cst_4 = arith.constant 9.99999974E-6 : f32
    %12 = vector.broadcast %cst_4 : f32 to vector<16x1xf32>
    %13 = arith.addf %11, %12 : vector<16x1xf32>
    %14 = math.rsqrt %13 : vector<16x1xf32>
    %15 = vector.broadcast %14 : vector<16x1xf32> to vector<16x32xf32>
    %16 = arith.mulf %6, %15 : vector<16x32xf32>
    %c0_5 = arith.constant 0 : index
    %c0_6 = arith.constant 0 : index
    %17 = vector.load %arg2[%c0_5, %c0_6] : memref<1x32xf32, #tpu.memory_space<vmem>>, vector<1x32xf32>
    %18 = vector.broadcast %17 : vector<1x32xf32> to vector<16x32xf32>
    %19 = arith.mulf %16, %18 : vector<16x32xf32>
    %c0_7 = arith.constant 0 : index
    %c0_8 = arith.constant 0 : index
    %20 = vector.load %arg3[%c0_7, %c0_8] : memref<1x32xf32, #tpu.memory_space<vmem>>, vector<1x32xf32>
    %21 = vector.broadcast %20 : vector<1x32xf32> to vector<16x32xf32>
    %22 = arith.addf %19, %21 : vector<16x32xf32>
    %23 = arith.truncf %22 : vector<16x32xf32> to vector<16x32xbf16>
    %c0_9 = arith.constant 0 : index
    %c0_10 = arith.constant 0 : index
    %24 = vector.load %arg4[%c0_9, %c0_10] : memref<32x128xbf16, #tpu.memory_space<vmem>>, vector<32x128xbf16>
    %cst_11 = arith.constant dense<0.000000e+00> : vector<16x128xf32>
    %25 = tpu.matmul %23, %24, %cst_11 {dimension_numbers = #tpu.dot_dimension_numbers<[1], [0], [0], [1], [0, 0, 1, 1], [], []>} : vector<16x32xbf16>, vector<32x128xbf16>, vector<16x128xf32> -> vector<16x128xf32>
    %c0_12 = arith.constant 0 : index
    %c0_13 = arith.constant 0 : index
    %26 = vector.load %arg5[%c0_12, %c0_13] : memref<1x128xf32, #tpu.memory_space<vmem>>, vector<1x128xf32>
    %27 = vector.broadcast %26 : vector<1x128xf32> to vector<16x128xf32>
    %28 = arith.addf %25, %27 : vector<16x128xf32>
    %cst_14 = arith.constant 1.702000e+00 : f32
    %29 = vector.broadcast %cst_14 : f32 to vector<16x128xf32>
    %30 = arith.mulf %29, %28 : vector<16x128xf32>
    %31 = arith.negf %30 : vector<16x128xf32>
    %32 = math.exp %31 : vector<16x128xf32>
    %cst_15 = arith.constant 1.000000e+00 : f32
    %33 = vector.broadcast %cst_15 : f32 to vector<16x128xf32>
    %34 = arith.addf %33, %32 : vector<16x128xf32>
    %35 = arith.divf %33, %34 : vector<16x128xf32>
    %36 = arith.mulf %28, %35 : vector<16x128xf32>
    %37 = arith.truncf %36 : vector<16x128xf32> to vector<16x128xbf16>
    %c0_16 = arith.constant 0 : index
    %c0_17 = arith.constant 0 : index
    %38 = vector.load %arg6[%c0_16, %c0_17] : memref<16x128xbf16, #tpu.memory_space<vmem>>, vector<16x128xbf16>
    tpu.vector_store %arg6[%c0_16, %c0_17], %37 {strides = array<i32>} : memref<16x128xbf16, #tpu.memory_space<vmem>>, vector<16x128xbf16>,
    return
  }
  func.func @transform_0(%arg0: i32) -> (i32, i32) {
    %c0_i32 = arith.constant 0 : i32
    %c0_i32_0 = arith.constant 0 : i32
    return %arg0, %c0_i32 : i32, i32
  }
  func.func @transform_1(%arg0: i32) -> (i32, i32) {
    %c0_i32 = arith.constant 0 : i32
    %c0_i32_0 = arith.constant 0 : i32
    %c0_i32_1 = arith.constant 0 : i32
    return %c0_i32, %c0_i32_0 : i32, i32
  }
  func.func @transform_2(%arg0: i32) -> (i32, i32) {
    %c0_i32 = arith.constant 0 : i32
    %c0_i32_0 = arith.constant 0 : i32
    %c0_i32_1 = arith.constant 0 : i32
    return %c0_i32, %c0_i32_0 : i32, i32
  }
  func.func @transform_3(%arg0: i32) -> (i32, i32) {
    %c0_i32 = arith.constant 0 : i32
    %c0_i32_0 = arith.constant 0 : i32
    %c0_i32_1 = arith.constant 0 : i32
    return %c0_i32, %c0_i32_0 : i32, i32
  }
  func.func @transform_4(%arg0: i32) -> (i32, i32) {
    %c0_i32 = arith.constant 0 : i32
    %c0_i32_0 = arith.constant 0 : i32
    %c0_i32_1 = arith.constant 0 : i32
    return %c0_i32, %c0_i32_0 : i32, i32
  }
  func.func @transform_5(%arg0: i32) -> (i32, i32) {
    %c0_i32 = arith.constant 0 : i32
    %c0_i32_0 = arith.constant 0 : i32
    return %arg0, %c0_i32 : i32, i32
  }
}

module attributes {stable_mosaic.version = 11 : i64} {
  func.func @_mm_kernel(%arg0: i32, %arg1: memref<16x128xbf16, #tpu.memory_space<vmem>>, %arg2: memref<128x32xbf16, #tpu.memory_space<vmem>>, %arg3: memref<1x32xf32, #tpu.memory_space<vmem>>, %arg4: memref<16x32xf32, #tpu.memory_space<vmem>>, %arg5: memref<16x32xf32, #tpu.memory_space<vmem>>) attributes {dimension_semantics = [#tpu.dimension_semantics<parallel>], iteration_bounds = array<i64: 1>, scalar_prefetch = 0 : i64, scratch_operands = 0 : i64, tpu.core_type = #tpu.core_type<tc>, window_params = [{transform_indices = @transform_0, window_bounds = array<i64: 16, 128>}, {pipeline_mode = #tpu.pipeline_mode<synchronous>, transform_indices = @transform_1, window_bounds = array<i64: 128, 32>}, {pipeline_mode = #tpu.pipeline_mode<synchronous>, transform_indices = @transform_2, window_bounds = array<i64: 1, 32>}, {transform_indices = @transform_3, window_bounds = array<i64: 16, 32>}, {transform_indices = @transform_4, window_bounds = array<i64: 16, 32>}]} {
    %c0 = arith.constant 0 : index
    %c0_0 = arith.constant 0 : index
    %0 = vector.load %arg1[%c0, %c0_0] : memref<16x128xbf16, #tpu.memory_space<vmem>>, vector<16x128xbf16>
    %c0_1 = arith.constant 0 : index
    %c0_2 = arith.constant 0 : index
    %1 = vector.load %arg2[%c0_1, %c0_2] : memref<128x32xbf16, #tpu.memory_space<vmem>>, vector<128x32xbf16>
    %cst = arith.constant dense<0.000000e+00> : vector<16x32xf32>
    %2 = tpu.matmul %0, %1, %cst {dimension_numbers = #tpu.dot_dimension_numbers<[1], [0], [0], [1], [0, 0, 1, 1], [], []>} : vector<16x128xbf16>, vector<128x32xbf16>, vector<16x32xf32> -> vector<16x32xf32>
    %c0_3 = arith.constant 0 : index
    %c0_4 = arith.constant 0 : index
    %3 = vector.load %arg3[%c0_3, %c0_4] : memref<1x32xf32, #tpu.memory_space<vmem>>, vector<1x32xf32>
    %4 = vector.broadcast %3 : vector<1x32xf32> to vector<16x32xf32>
    %5 = arith.addf %2, %4 : vector<16x32xf32>
    %c0_5 = arith.constant 0 : index
    %c0_6 = arith.constant 0 : index
    %6 = vector.load %arg4[%c0_5, %c0_6] : memref<16x32xf32, #tpu.memory_space<vmem>>, vector<16x32xf32>
    %7 = arith.addf %5, %6 : vector<16x32xf32>
    %c0_7 = arith.constant 0 : index
    %c0_8 = arith.constant 0 : index
    %8 = vector.load %arg5[%c0_7, %c0_8] : memref<16x32xf32, #tpu.memory_space<vmem>>, vector<16x32xf32>
    tpu.vector_store %arg5[%c0_7, %c0_8], %7 {strides = array<i32>} : memref<16x32xf32, #tpu.memory_space<vmem>>, vector<16x32xf32>,
    return
  }
  func.func @transform_0(%arg0: i32) -> (i32, i32) {
    %c0_i32 = arith.constant 0 : i32
    %c0_i32_0 = arith.constant 0 : i32
    return %arg0, %c0_i32 : i32, i32
  }
  func.func @transform_1(%arg0: i32) -> (i32, i32) {
    %c0_i32 = arith.constant 0 : i32
    %c0_i32_0 = arith.constant 0 : i32
    %c0_i32_1 = arith.constant 0 : i32
    return %c0_i32, %c0_i32_0 : i32, i32
  }
  func.func @transform_2(%arg0: i32) -> (i32, i32) {
    %c0_i32 = arith.constant 0 : i32
    %c0_i32_0 = arith.constant 0 : i32
    %c0_i32_1 = arith.constant 0 : i32
    return %c0_i32, %c0_i32_0 : i32, i32
  }
  func.func @transform_3(%arg0: i32) -> (i32, i32) {
    %c0_i32 = arith.constant 0 : i32
    %c0_i32_0 = arith.constant 0 : i32
    return %arg0, %c0_i32 : i32, i32
  }
  func.func @transform_4(%arg0: i32) -> (i32, i32) {
    %c0_i32 = arith.constant 0 : i32
    %c0_i32_0 = arith.constant 0 : i32
    return %arg0, %c0_i32 : i32, i32
  }
}

module attributes {stable_mosaic.version = 11 : i64} {
  func.func @_ln_mm_kernel(%arg0: i32, %arg1: memref<8x32xf32, #tpu.memory_space<vmem>>, %arg2: memref<1x32xf32, #tpu.memory_space<vmem>>, %arg3: memref<1x32xf32, #tpu.memory_space<vmem>>, %arg4: memref<32x16xbf16, #tpu.memory_space<vmem>>, %arg5: memref<8x16xf32, #tpu.memory_space<vmem>>) attributes {dimension_semantics = [#tpu.dimension_semantics<parallel>], iteration_bounds = array<i64: 1>, scalar_prefetch = 0 : i64, scratch_operands = 0 : i64, tpu.core_type = #tpu.core_type<tc>, window_params = [{transform_indices = @transform_0, window_bounds = array<i64: 8, 32>}, {pipeline_mode = #tpu.pipeline_mode<synchronous>, transform_indices = @transform_1, window_bounds = array<i64: 1, 32>}, {pipeline_mode = #tpu.pipeline_mode<synchronous>, transform_indices = @transform_2, window_bounds = array<i64: 1, 32>}, {pipeline_mode = #tpu.pipeline_mode<synchronous>, transform_indices = @transform_3, window_bounds = array<i64: 32, 16>}, {transform_indices = @transform_4, window_bounds = array<i64: 8, 16>}]} {
    %c0 = arith.constant 0 : index
    %c0_0 = arith.constant 0 : index
    %0 = vector.load %arg1[%c0, %c0_0] : memref<8x32xf32, #tpu.memory_space<vmem>>, vector<8x32xf32>
    %cst = arith.constant dense<0.000000e+00> : vector<8xf32>
    %1 = vector.multi_reduction <add>, %0, %cst [1] : vector<8x32xf32> to vector<8xf32>
    %2 = vector.shape_cast %1 : vector<8xf32> to vector<8x1xf32>
    %cst_1 = arith.constant 3.200000e+01 : f32
    %3 = vector.broadcast %cst_1 : f32 to vector<8x1xf32>
    %4 = arith.divf %2, %3 : vector<8x1xf32>
    %5 = vector.broadcast %4 : vector<8x1xf32> to vector<8x32xf32>
    %6 = arith.subf %0, %5 : vector<8x32xf32>
    %7 = arith.mulf %6, %6 : vector<8x32xf32>
    %cst_2 = arith.constant dense<0.000000e+00> : vector<8xf32>
    %8 = vector.multi_reduction <add>, %7, %cst_2 [1] : vector<8x32xf32> to vector<8xf32>
    %9 = vector.shape_cast %8 : vector<8xf32> to vector<8x1xf32>
    %cst_3 = arith.constant 3.200000e+01 : f32
    %10 = vector.broadcast %cst_3 : f32 to vector<8x1xf32>
    %11 = arith.divf %9, %10 : vector<8x1xf32>
    %cst_4 = arith.constant 9.99999974E-6 : f32
    %12 = vector.broadcast %cst_4 : f32 to vector<8x1xf32>
    %13 = arith.addf %11, %12 : vector<8x1xf32>
    %14 = math.rsqrt %13 : vector<8x1xf32>
    %15 = vector.broadcast %14 : vector<8x1xf32> to vector<8x32xf32>
    %16 = arith.mulf %6, %15 : vector<8x32xf32>
    %c0_5 = arith.constant 0 : index
    %c0_6 = arith.constant 0 : index
    %17 = vector.load %arg2[%c0_5, %c0_6] : memref<1x32xf32, #tpu.memory_space<vmem>>, vector<1x32xf32>
    %18 = vector.broadcast %17 : vector<1x32xf32> to vector<8x32xf32>
    %19 = arith.mulf %16, %18 : vector<8x32xf32>
    %c0_7 = arith.constant 0 : index
    %c0_8 = arith.constant 0 : index
    %20 = vector.load %arg3[%c0_7, %c0_8] : memref<1x32xf32, #tpu.memory_space<vmem>>, vector<1x32xf32>
    %21 = vector.broadcast %20 : vector<1x32xf32> to vector<8x32xf32>
    %22 = arith.addf %19, %21 : vector<8x32xf32>
    %23 = arith.truncf %22 : vector<8x32xf32> to vector<8x32xbf16>
    %c0_9 = arith.constant 0 : index
    %c0_10 = arith.constant 0 : index
    %24 = vector.load %arg4[%c0_9, %c0_10] : memref<32x16xbf16, #tpu.memory_space<vmem>>, vector<32x16xbf16>
    %cst_11 = arith.constant dense<0.000000e+00> : vector<8x16xf32>
    %25 = tpu.matmul %23, %24, %cst_11 {dimension_numbers = #tpu.dot_dimension_numbers<[1], [0], [0], [1], [0, 0, 1, 1], [], []>} : vector<8x32xbf16>, vector<32x16xbf16>, vector<8x16xf32> -> vector<8x16xf32>
    %c0_12 = arith.constant 0 : index
    %c0_13 = arith.constant 0 : index
    %26 = vector.load %arg5[%c0_12, %c0_13] : memref<8x16xf32, #tpu.memory_space<vmem>>, vector<8x16xf32>
    tpu.vector_store %arg5[%c0_12, %c0_13], %25 {strides = array<i32>} : memref<8x16xf32, #tpu.memory_space<vmem>>, vector<8x16xf32>,
    return
  }
  func.func @transform_0(%arg0: i32) -> (i32, i32) {
    %c0_i32 = arith.constant 0 : i32
    %c0_i32_0 = arith.constant 0 : i32
    return %arg0, %c0_i32 : i32, i32
  }
  func.func @transform_1(%arg0: i32) -> (i32, i32) {
    %c0_i32 = arith.constant 0 : i32
    %c0_i32_0 = arith.constant 0 : i32
    %c0_i32_1 = arith.constant 0 : i32
    return %c0_i32, %c0_i32_0 : i32, i32
  }
  func.func @transform_2(%arg0: i32) -> (i32, i32) {
    %c0_i32 = arith.constant 0 : i32
    %c0_i32_0 = arith.constant 0 : i32
    %c0_i32_1 = arith.constant 0 : i32
    return %c0_i32, %c0_i32_0 : i32, i32
  }
  func.func @transform_3(%arg0: i32) -> (i32, i32) {
    %c0_i32 = arith.constant 0 : i32
    %c0_i32_0 = arith.constant 0 : i32
    %c0_i32_1 = arith.constant 0 : i32
    return %c0_i32, %c0_i32_0 : i32, i32
  }
  func.func @transform_4(%arg0: i32) -> (i32, i32) {
    %c0_i32 = arith.constant 0 : i32
    %c0_i32_0 = arith.constant 0 : i32
    return %arg0, %c0_i32 : i32, i32
  }
}

</mosaic_0001>

<llo_original>
// kernel: clip_encode_image.14
$region0: #{clip_encode_image.14}
  #allocation0 [shape = 'u32[]', space=smem, size = 0x4, offset = 0x4, fixed_abs, tag = 'smem constant byte address 0x4 - core index']
  #allocation1 [shape = 'u32[72,128]{1,0:T(1,128)}', space=vmem, size = 0x9000, scoped, tag = 'internal scratch']
  %s0 = inlined_call_operand.vmem [shape: f32[16,32], index: 0, kind: input, shape index: {}]
  %s1 = inlined_call_operand.vmem [shape: f32[1,32], index: 1, kind: input, shape index: {}]
  %s2 = inlined_call_operand.vmem [shape: f32[1,32], index: 2, kind: input, shape index: {}]
  %s3 = inlined_call_operand.vmem [shape: f32[16,32], index: 3, kind: output, shape index: {}]
  %s4 = sld [smem:[#allocation0]]
  $region22: #{clip_encode_image.14} parent=0
    _
  %s6 = ssub.s32 1, %s4
  %s7 = scalar_select 0, %s6, %s4
  // Predicated region
  $region2: #{clip_encode_image.14} parent=0 // pred_check
    _
  $region3: #{clip_encode_image.14} parent=0 // pred_check_branch
    %9 = sbr.rel (0) target = $region5
  $region4: #{clip_encode_image.14} parent=0 // pred_region
    _
  $region5: #{clip_encode_image.14} parent=0 // pred_fallthru
    _
  // Predicated region
  $region6: #{clip_encode_image.14} parent=0 // pred_check
    _
  $region7: #{clip_encode_image.14} parent=0 // pred_check_branch
    %11 = sbr.rel (0) target = $region9
  $region8: #{clip_encode_image.14} parent=0 // pred_region
    _
  $region9: #{clip_encode_image.14} parent=0 // pred_fallthru
    _
  // Predicated region
  $region10: #{clip_encode_image.14} parent=0 // pred_check
    _
  $region11: #{clip_encode_image.14} parent=0 // pred_check_branch
    %13 = sbr.rel (0) target = $region13
  $region12: #{clip_encode_image.14} parent=0 // pred_region
    _
  $region13: #{clip_encode_image.14} parent=0 // pred_fallthru
    _
  %v14 = vld [vmem:[%s0] sm:$0xff]
  %v15 = vld [vmem:[%s0 + $0x8] sm:$0xff]
  %vm16 = vcmask 261120
  %v17 = vsel %vm16, %v14, 0.0
  %18 = vadd.xlane.f32.xlu0 %v17
  %v19 = vpop.xlane.xlu0 %18
  %v20 = vsel %vm16, %v15, 0.0
  %21 = vadd.xlane.f32.xlu0 %v20
  %v22 = vpop.xlane.xlu0 %21
  %v23 = vrcp.pop 32.0
  %v24 = vmul.f32 32.0, %v23
  %v25 = vsub.f32 1.0, %v24
  %v26 = vmul.f32 %v23, %v25
  %v27 = vadd.f32 %v23, %v26
  %vm28 = vweird.f32 %v23
  %v29 = vsel %vm28, %v23, %v27
  %v30 = vmul.f32 %v19, %v29
  %v31 = vmul.f32 %v22, %v29
  %v32 = vsub.f32 %v14, %v30
  %v33 = vsub.f32 %v15, %v31
  %v34 = vmul.f32 %v32, %v32
  %v35 = vmul.f32 %v33, %v33
  %v36 = vsel %vm16, %v34, 0.0
  %37 = vadd.xlane.f32.xlu0 %v36
  %v38 = vpop.xlane.xlu0 %37
  %v39 = vsel %vm16, %v35, 0.0
  %40 = vadd.xlane.f32.xlu0 %v39
  %v41 = vpop.xlane.xlu0 %40
  %v42 = vmul.f32 %v38, %v29
  %v43 = vmul.f32 %v41, %v29
  %v44 = vadd.f32 %v42, 1e-05
  %v45 = vadd.f32 %v43, 1e-05
  %v46 = vrsqrt.pop %v44
  %v47 = vmul.f32 %v46, %v44
  %v48 = vmul.f32 %v47, %v46
  %v49 = vmul.f32 0.5, %v48
  %v50 = vsub.f32 1.5, %v49
  %v51 = vmul.f32 %v46, %v50
  %vm52 = vweird.f32 %v44
  %vm53 = vweird.f32 %v46
  %vm54 = vmor %vm52, %vm53
  %v55 = vsel %vm54, %v46, %v51
  %v56 = vrsqrt.pop %v45
  %v57 = vmul.f32 %v56, %v45
  %v58 = vmul.f32 %v57, %v56
  %v59 = vmul.f32 0.5, %v58
  %v60 = vsub.f32 1.5, %v59
  %v61 = vmul.f32 %v56, %v60
  %vm62 = vweird.f32 %v45
  %vm63 = vweird.f32 %v56
  %vm64 = vmor %vm62, %vm63
  %v65 = vsel %vm64, %v56, %v61
  %v66 = vmul.f32 %v32, %v55
  %v67 = vmul.f32 %v33, %v65
  %v68 = vld [vmem:[%s1] sm:$0x1]
  %v70 = vperm.slane %v68, 0
  %v72 = vmul.f32 %v66, %v70
  %v73 = vmul.f32 %v67, %v70
  %v74 = vld [vmem:[%s2] sm:$0x1]
  %v76 = vperm.slane %v74, 0
  %v78 = vadd.f32 %v72, %v76
  %v79 = vadd.f32 %v73, %v76
  %80 = vst.msk [vmem:[%s3] sm:$0xff] %vm16, %v78
  %81 = vst.msk [vmem:[%s3 + $0x8] sm:$0xff] %vm16, %v79
  // Predicated region
  $region14: #{clip_encode_image.14} parent=0 // pred_check
    _
  $region15: #{clip_encode_image.14} parent=0 // pred_check_branch
    %83 = sbr.rel (0) target = $region17
  $region16: #{clip_encode_image.14} parent=0 // pred_region
    _
  $region17: #{clip_encode_image.14} parent=0 // pred_fallthru
    _
  // Predicated region
  $region18: #{clip_encode_image.14} parent=0 // pred_check
    _
  $region19: #{clip_encode_image.14} parent=0 // pred_check_branch
    %85 = sbr.rel (0) target = $region21
  $region20: #{clip_encode_image.14} parent=0 // pred_region
    _
  $region21: #{clip_encode_image.14} parent=0 // pred_fallthru
    _

// kernel: clip_encode_image.13
$region0: #{clip_encode_image.13}
  #allocation0 [shape = 'u32[]', space=smem, size = 0x4, offset = 0x4, fixed_abs, tag = 'smem constant byte address 0x4 - core index']
  #allocation1 [shape = 'u32[72,128]{1,0:T(1,128)}', space=vmem, size = 0x9000, scoped, tag = 'internal scratch']
  %s0 = inlined_call_operand.vmem [shape: f32[8,192], index: 0, kind: input, shape index: {}]
  %s1 = inlined_call_operand.vmem [shape: bf16[192,32], index: 1, kind: input, shape index: {}]
  %s2 = inlined_call_operand.vmem [shape: f32[8,32], index: 2, kind: output, shape index: {}]
  %s3 = sld [smem:[#allocation0]]
  $region18: #{clip_encode_image.13} parent=0
    _
  %s5 = ssub.s32 1, %s3
  %s6 = scalar_select 0, %s5, %s3
  // Predicated region
  $region2: #{clip_encode_image.13} parent=0 // pred_check
    _
  $region3: #{clip_encode_image.13} parent=0 // pred_check_branch
    %8 = sbr.rel (0) target = $region5
  $region4: #{clip_encode_image.13} parent=0 // pred_region
    _
  $region5: #{clip_encode_image.13} parent=0 // pred_fallthru
    _
  // Predicated region
  $region6: #{clip_encode_image.13} parent=0 // pred_check
    _
  $region7: #{clip_encode_image.13} parent=0 // pred_check_branch
    %10 = sbr.rel (0) target = $region9
  $region8: #{clip_encode_image.13} parent=0 // pred_region
    _
  $region9: #{clip_encode_image.13} parent=0 // pred_fallthru
    _
  %v12 = vld [vmem:[%s0] sm:$0xff]
  %v13 = vld [vmem:[%s0 + $0x8] sm:$0xff]
  %v14 = vpack.c.bf16 %v12, %v12
  %v15 = vpack.c.bf16 %v13, %v13
  %v16 = vld [vmem:[%s1] sm:$0xf]
  %v17 = vld [vmem:[%s1 + $0x4] sm:$0xf]
  %v18 = vld [vmem:[%s1 + $0x8] sm:$0xf]
  %v19 = vld [vmem:[%s1 + $0xc] sm:$0xf]
  %v20 = vld [vmem:[%s1 + $0x10] sm:$0xf]
  %v21 = vld [vmem:[%s1 + $0x14] sm:$0xf]
  %v22 = vld [vmem:[%s1 + $0x18] sm:$0xf]
  %v23 = vld [vmem:[%s1 + $0x1c] sm:$0xf]
  %v24 = vld [vmem:[%s1 + $0x20] sm:$0xf]
  %v25 = vld [vmem:[%s1 + $0x24] sm:$0xf]
  %v26 = vld [vmem:[%s1 + $0x28] sm:$0xf]
  %v27 = vld [vmem:[%s1 + $0x2c] sm:$0xf]
  %v28 = vld [vmem:[%s1 + $0x30] sm:$0xf]
  %v29 = vld [vmem:[%s1 + $0x34] sm:$0xf]
  %v30 = vld [vmem:[%s1 + $0x38] sm:$0xf]
  %v31 = vld [vmem:[%s1 + $0x3c] sm:$0xf]
  %v32 = vld [vmem:[%s1 + $0x40] sm:$0xf]
  %v33 = vld [vmem:[%s1 + $0x44] sm:$0xf]
  %v34 = vld [vmem:[%s1 + $0x48] sm:$0xf]
  %v35 = vld [vmem:[%s1 + $0x4c] sm:$0xf]
  %v36 = vld [vmem:[%s1 + $0x50] sm:$0xf]
  %v37 = vld [vmem:[%s1 + $0x54] sm:$0xf]
  %v38 = vld [vmem:[%s1 + $0x58] sm:$0xf]
  %v39 = vld [vmem:[%s1 + $0x5c] sm:$0xf]
  %v64 = vunpack.c.l.b16 %v16
  %v65 = vunpack.c.l.b16 %v17
  %v66 = vunpack.c.l.b16 %v18
  %v67 = vunpack.c.l.b16 %v19
  %v68 = vunpack.c.l.b16 %v20
  %v69 = vunpack.c.l.b16 %v21
  %v70 = vunpack.c.l.b16 %v22
  %v71 = vunpack.c.l.b16 %v23
  %v72 = vunpack.c.l.b16 %v24
  %v73 = vunpack.c.l.b16 %v25
  %v74 = vunpack.c.l.b16 %v26
  %v75 = vunpack.c.l.b16 %v27
  %v76 = vunpack.c.l.b16 %v28
  %v77 = vunpack.c.l.b16 %v29
  %v78 = vunpack.c.l.b16 %v30
  %v79 = vunpack.c.l.b16 %v31
  %v80 = vunpack.c.l.b16 %v32
  %v81 = vunpack.c.l.b16 %v33
  %v82 = vunpack.c.l.b16 %v34
  %v83 = vunpack.c.l.b16 %v35
  %v84 = vunpack.c.l.b16 %v36
  %v85 = vunpack.c.l.b16 %v37
  %v86 = vunpack.c.l.b16 %v38
  %v87 = vunpack.c.l.b16 %v39
  %v88 = vpack.c.b16 %v65, %v64
  %v89 = vpack.c.b16 %v67, %v66
  %v90 = vpack.c.b16 %v69, %v68
  %v91 = vpack.c.b16 %v71, %v70
  %v92 = vpack.c.b16 %v73, %v72
  %v93 = vpack.c.b16 %v75, %v74
  %v94 = vpack.c.b16 %v77, %v76
  %v95 = vpack.c.b16 %v79, %v78
  %v96 = vpack.c.b16 %v81, %v80
  %v97 = vpack.c.b16 %v83, %v82
  %v98 = vpack.c.b16 %v85, %v84
  %v99 = vpack.c.b16 %v87, %v86
  %vm112 = vcmask 523264
  %v114 = vsel %vm112, %v15, 0
  %116 = vmatpush.bf16.msra.mxu0 %v95
  %117 = vmatpush.bf16.msra.mxu0 %v94
  %118 = vmatpush.bf16.msra.mxu0 %v93
  %119 = vmatpush.bf16.msra.mxu0 %v92
  %120 = vmatpush.bf16.msra.mxu0 %v91
  %121 = vmatpush.bf16.msra.mxu0 %v90
  %122 = vmatpush.bf16.msra.mxu0 %v89
  %123 = vmatpush.bf16.msra.mxu0 %v88
  %124 = vmatmul.bf16.gmra.mxu0 %v14
  %v125 = vpop.f32.mrf.mxu0
  %v126 = vadd.f32 0.0, %v125
  %v127 = vpop.f32.mrf.mxu0
  %128 = vdwg.mxu0
  %129 = vmatpush.bf16.msra.mxu0 0
  %130 = vmatpush.bf16.msra.mxu0 0
  %131 = vmatpush.bf16.msra.mxu0 0
  %132 = vmatpush.bf16.msra.mxu0 0
  %133 = vmatpush.bf16.msra.mxu0 %v99
  %134 = vmatpush.bf16.msra.mxu0 %v98
  %135 = vmatpush.bf16.msra.mxu0 %v97
  %136 = vmatpush.bf16.msra.mxu0 %v96
  %137 = vmatmul.bf16.gmra.mxu0 %v114
  %v138 = vpop.f32.mrf.mxu0
  %v139 = vadd.f32 %v126, %v138
  %v140 = vpop.f32.mrf.mxu0
  %141 = vdwg.mxu0
  %vm142 = vcmask 261120
  %143 = vst.msk [vmem:[%s2] sm:$0xff] %vm142, %v139
  // Predicated region
  $region10: #{clip_encode_image.13} parent=0 // pred_check
    _
  $region11: #{clip_encode_image.13} parent=0 // pred_check_branch
    %145 = sbr.rel (0) target = $region13
  $region12: #{clip_encode_image.13} parent=0 // pred_region
    _
  $region13: #{clip_encode_image.13} parent=0 // pred_fallthru
    _
  // Predicated region
  $region14: #{clip_encode_image.13} parent=0 // pred_check
    _
  $region15: #{clip_encode_image.13} parent=0 // pred_check_branch
    %147 = sbr.rel (0) target = $region17
  $region16: #{clip_encode_image.13} parent=0 // pred_region
    _
  $region17: #{clip_encode_image.13} parent=0 // pred_fallthru
    _

// kernel: clip_encode_image.15
$region0: #{clip_encode_image.15}
  #allocation0 [shape = 'u32[]', space=smem, size = 0x4, offset = 0x4, fixed_abs, tag = 'smem constant byte address 0x4 - core index']
  #allocation1 [shape = 'u32[72,128]{1,0:T(1,128)}', space=vmem, size = 0x9000, scoped, tag = 'internal scratch']
  %s0 = inlined_call_operand.vmem [shape: f32[16,32], index: 0, kind: input, shape index: {}]
  %s1 = inlined_call_operand.vmem [shape: f32[1,32], index: 1, kind: input, shape index: {}]
  %s2 = inlined_call_operand.vmem [shape: f32[1,32], index: 2, kind: input, shape index: {}]
  %s3 = inlined_call_operand.vmem [shape: bf16[32,96], index: 3, kind: input, shape index: {}]
  %s4 = inlined_call_operand.vmem [shape: f32[1,96], index: 4, kind: input, shape index: {}]
  %s5 = inlined_call_operand.vmem [shape: bf16[16,96], index: 5, kind: output, shape index: {}]
  %s6 = sld [smem:[#allocation0]]
  $region30: #{clip_encode_image.15} parent=0
    _
  %s8 = ssub.s32 1, %s6
  %s9 = scalar_select 0, %s8, %s6
  // Predicated region
  $region2: #{clip_encode_image.15} parent=0 // pred_check
    _
  $region3: #{clip_encode_image.15} parent=0 // pred_check_branch
    %11 = sbr.rel (0) target = $region5
  $region4: #{clip_encode_image.15} parent=0 // pred_region
    _
  $region5: #{clip_encode_image.15} parent=0 // pred_fallthru
    _
  // Predicated region
  $region6: #{clip_encode_image.15} parent=0 // pred_check
    _
  $region7: #{clip_encode_image.15} parent=0 // pred_check_branch
    %13 = sbr.rel (0) target = $region9
  $region8: #{clip_encode_image.15} parent=0 // pred_region
    _
  $region9: #{clip_encode_image.15} parent=0 // pred_fallthru
    _
  // Predicated region
  $region10: #{clip_encode_image.15} parent=0 // pred_check
    _
  $region11: #{clip_encode_image.15} parent=0 // pred_check_branch
    %15 = sbr.rel (0) target = $region13
  $region12: #{clip_encode_image.15} parent=0 // pred_region
    _
  $region13: #{clip_encode_image.15} parent=0 // pred_fallthru
    _
  // Predicated region
  $region14: #{clip_encode_image.15} parent=0 // pred_check
    _
  $region15: #{clip_encode_image.15} parent=0 // pred_check_branch
    %17 = sbr.rel (0) target = $region17
  $region16: #{clip_encode_image.15} parent=0 // pred_region
    _
  $region17: #{clip_encode_image.15} parent=0 // pred_fallthru
    _
  // Predicated region
  $region18: #{clip_encode_image.15} parent=0 // pred_check
    _
  $region19: #{clip_encode_image.15} parent=0 // pred_check_branch
    %19 = sbr.rel (0) target = $region21
  $region20: #{clip_encode_image.15} parent=0 // pred_region
    _
  $region21: #{clip_encode_image.15} parent=0 // pred_fallthru
    _
  %v21 = vld [vmem:[%s0] sm:$0xff]
  %v22 = vld [vmem:[%s0 + $0x8] sm:$0xff]
  %vm23 = vcmask 261120
  %v24 = vsel %vm23, %v21, 0.0
  %25 = vadd.xlane.f32.xlu0 %v24
  %v26 = vpop.xlane.xlu0 %25
  %v27 = vsel %vm23, %v22, 0.0
  %28 = vadd.xlane.f32.xlu0 %v27
  %v29 = vpop.xlane.xlu0 %28
  %v30 = vrcp.pop 32.0
  %v31 = vmul.f32 32.0, %v30
  %v32 = vsub.f32 1.0, %v31
  %v33 = vmul.f32 %v30, %v32
  %v34 = vadd.f32 %v30, %v33
  %vm35 = vweird.f32 %v30
  %v36 = vsel %vm35, %v30, %v34
  %v37 = vmul.f32 %v26, %v36
  %v38 = vmul.f32 %v29, %v36
  %v39 = vsub.f32 %v21, %v37
  %v40 = vsub.f32 %v22, %v38
  %v41 = vmul.f32 %v39, %v39
  %v42 = vmul.f32 %v40, %v40
  %v43 = vsel %vm23, %v41, 0.0
  %44 = vadd.xlane.f32.xlu0 %v43
  %v45 = vpop.xlane.xlu0 %44
  %v46 = vsel %vm23, %v42, 0.0
  %47 = vadd.xlane.f32.xlu0 %v46
  %v48 = vpop.xlane.xlu0 %47
  %v49 = vmul.f32 %v45, %v36
  %v50 = vmul.f32 %v48, %v36
  %v51 = vadd.f32 %v49, 1e-05
  %v52 = vadd.f32 %v50, 1e-05
  %v53 = vrsqrt.pop %v51
  %v54 = vmul.f32 %v53, %v51
  %v55 = vmul.f32 %v54, %v53
  %v56 = vmul.f32 0.5, %v55
  %v57 = vsub.f32 1.5, %v56
  %v58 = vmul.f32 %v53, %v57
  %vm59 = vweird.f32 %v51
  %vm60 = vweird.f32 %v53
  %vm61 = vmor %vm59, %vm60
  %v62 = vsel %vm61, %v53, %v58
  %v63 = vrsqrt.pop %v52
  %v64 = vmul.f32 %v63, %v52
  %v65 = vmul.f32 %v64, %v63
  %v66 = vmul.f32 0.5, %v65
  %v67 = vsub.f32 1.5, %v66
  %v68 = vmul.f32 %v63, %v67
  %vm69 = vweird.f32 %v52
  %vm70 = vweird.f32 %v63
  %vm71 = vmor %vm69, %vm70
  %v72 = vsel %vm71, %v63, %v68
  %v73 = vmul.f32 %v39, %v62
  %v74 = vmul.f32 %v40, %v72
  %v75 = vld [vmem:[%s1] sm:$0x1]
  %v77 = vperm.slane %v75, 0
  %v79 = vmul.f32 %v73, %v77
  %v80 = vmul.f32 %v74, %v77
  %v81 = vld [vmem:[%s2] sm:$0x1]
  %v83 = vperm.slane %v81, 0
  %v85 = vadd.f32 %v79, %v83
  %v86 = vadd.f32 %v80, %v83
  %v87 = vpack.c.bf16 %v86, %v85
  %v88 = vld [vmem:[%s3] sm:$0xf]
  %v89 = vld [vmem:[%s3 + $0x4] sm:$0xf]
  %v90 = vld [vmem:[%s3 + $0x8] sm:$0xf]
  %v91 = vld [vmem:[%s3 + $0xc] sm:$0xf]
  %v92 = vld [vmem:[%s4] sm:$0x1]
  %v94 = vperm.slane %v92, 0
  %v100 = vunpack.c.l.b16 %v88
  %v101 = vunpack.c.l.b16 %v89
  %v102 = vunpack.c.l.b16 %v90
  %v103 = vunpack.c.l.b16 %v91
  %v104 = vpack.c.b16 %v101, %v100
  %v105 = vpack.c.b16 %v103, %v102
  %v109 = vsel %vm23, %v87, 0
  %111 = vmatpush.bf16.msra.mxu0 0
  %112 = vmatpush.bf16.msra.mxu0 0
  %113 = vmatpush.bf16.msra.mxu0 0
  %114 = vmatpush.bf16.msra.mxu0 0
  %115 = vmatpush.bf16.msra.mxu0 0
  %116 = vmatpush.bf16.msra.mxu0 0
  %117 = vmatpush.bf16.msra.mxu0 %v105
  %118 = vmatpush.bf16.msra.mxu0 %v104
  %119 = vmatmul.bf16.gmra.mxu0 %v109
  %v120 = vpop.f32.mrf.mxu0
  %v121 = vadd.f32 %v94, %v120
  %v122 = vpop.f32.mrf.mxu0
  %v123 = vadd.f32 %v94, %v122
  %124 = vdwg.mxu0
  %v125 = vpack.c.bf16 %v121, %v121
  %v126 = vpack.c.bf16 %v123, %v123
  %vm127 = vcmask 781312
  %128 = vst.msk [vmem:[%s5] sm:$0xf] %vm127, %v125
  %129 = vst.msk [vmem:[%s5 + $0x4] sm:$0xf] %vm127, %v126
  // Predicated region
  $region22: #{clip_encode_image.15} parent=0 // pred_check
    _
  $region23: #{clip_encode_image.15} parent=0 // pred_check_branch
    %131 = sbr.rel (0) target = $region25
  $region24: #{clip_encode_image.15} parent=0 // pred_region
    _
  $region25: #{clip_encode_image.15} parent=0 // pred_fallthru
    _
  // Predicated region
  $region26: #{clip_encode_image.15} parent=0 // pred_check
    _
  $region27: #{clip_encode_image.15} parent=0 // pred_check_branch
    %133 = sbr.rel (0) target = $region29
  $region28: #{clip_encode_image.15} parent=0 // pred_region
    _
  $region29: #{clip_encode_image.15} parent=0 // pred_fallthru
    _

// kernel: clip_encode_image.16
$region0: #{clip_encode_image.16}
  #allocation0 [shape = 'u32[]', space=smem, size = 0x4, offset = 0x4, fixed_abs, tag = 'smem constant byte address 0x4 - core index']
  #allocation1 [shape = 'u32[72,128]{1,0:T(1,128)}', space=vmem, size = 0x9000, scoped, tag = 'internal scratch']
  %s0 = inlined_call_operand.vmem [shape: bf16[2,8,96], index: 0, kind: input, shape index: {}]
  %s1 = inlined_call_operand.vmem [shape: bf16[2,8,32], index: 1, kind: output, shape index: {}]
  %s2 = sld [smem:[#allocation0]]
  $region37: #{clip_encode_image.16} parent=0
    _
  %s4 = ssub.s32 1, %s2
  %s5 = scalar_select 0, %s4, %s2
  loop: start=0, step=1, limit=4
  $region2: #{clip_encode_image.16} parent=0 // loop_pre_header
    _
  $region3: #{clip_encode_image.16} parent=0 // loop_header
    %s7 = sphi 0, %s11
    %p8 = scmp.ge.s32.totalorder %s7, 4
    %s17 = sphi 0, %s19
    %s20 = sphi 0, %s17
    %s21 = sphi 0, %s20
    %s37 = sphi 0, %s21
    %s43 = sphi 0, %s45
    %s46 = sphi 0, %s43
    %s47 = sphi 0, %s46
    %s63 = sphi 0, %s47
  $region4: #{clip_encode_image.16} parent=0 // loop_header_branch
    %10 = sbr.rel (%p8) target = $region8
  $region5: #{clip_encode_image.16} parent=0 // loop_body
    %s12 = ssub.s32 %s7, 1
    %s13 = ssub.s32 %s7, 2
    %s14 = sadd.s32 %s7, 1
    %s15 = ssub.s32 %s7, %s14
    %p16 = scmp.eq.s32.totalorder %s15, 0
    %s18 = sadd.s32 %s17, 1
    %s19 = scalar_select %p16, %s17, %s18
    %p22 = pneg %p16
    %p23 = scmp.eq.s32.totalorder %s7, 1
    %p24 = por %p22, %p23
    %p25 = scmp.ne.s32.totalorder %s17, %s20
    %p26 = scmp.eq.s32.totalorder %s7, 0
    %p27 = por %p25, %p26
    %p28 = scmp.ne.s32.totalorder %s17, %s20
    %p29 = scmp.eq.s32.totalorder %s12, 1
    %p30 = por %p28, %p29
    %p31 = scmp.ne.s32.totalorder %s20, %s21
    %p32 = scmp.eq.s32.totalorder %s12, 0
    %p33 = por %p31, %p32
    %p34 = scmp.ne.s32.totalorder %s20, %s21
    %p35 = scmp.eq.s32.totalorder %s13, 1
    %p36 = por %p34, %p35
    %p38 = scmp.ne.s32.totalorder %s21, %s37
    %p39 = scmp.eq.s32.totalorder %s13, 0
    %p40 = por %p38, %p39
    %s41 = ssub.s32 %s7, %s14
    %p42 = scmp.eq.s32.totalorder %s41, 0
    %s44 = sadd.s32 %s43, 1
    %s45 = scalar_select %p42, %s43, %s44
    %p48 = pneg %p42
    %p49 = scmp.eq.s32.totalorder %s7, 1
    %p50 = por %p48, %p49
    %p51 = scmp.ne.s32.totalorder %s43, %s46
    %p52 = scmp.eq.s32.totalorder %s7, 0
    %p53 = por %p51, %p52
    %p54 = scmp.ne.s32.totalorder %s43, %s46
    %p55 = scmp.eq.s32.totalorder %s12, 1
    %p56 = por %p54, %p55
    %p57 = scmp.ne.s32.totalorder %s46, %s47
    %p58 = scmp.eq.s32.totalorder %s12, 0
    %p59 = por %p57, %p58
    %p60 = scmp.ne.s32.totalorder %s46, %s47
    %p61 = scmp.eq.s32.totalorder %s13, 1
    %p62 = por %p60, %p61
    %p64 = scmp.ne.s32.totalorder %s47, %s63
    %p65 = scmp.eq.s32.totalorder %s13, 0
    %p66 = por %p64, %p65
    %p67 = scmp.le.s32.totalorder 1, %s7
    %p68 = scmp.lt.s32.totalorder %s7, 3
    %p69 = pnand %p67, %p68
    %p70 = pneg %p69
    // Predicated region
    $region9: #{clip_encode_image.16} parent=5 // pred_check
      _
    $region10: #{clip_encode_image.16} parent=5 // pred_check_branch
      %72 = sbr.rel (%p69) target = $region12
    $region11: #{clip_encode_image.16} parent=5 // pred_region
      %s73 = ssub.s32 %s7, 1
    $region12: #{clip_encode_image.16} parent=5 // pred_fallthru
      _
    %p74 = scmp.lt.s32.totalorder %s7, 2
    // Predicated region
    $region13: #{clip_encode_image.16} parent=5 // pred_check
      %p75 = pneg %p74
    $region14: #{clip_encode_image.16} parent=5 // pred_check_branch
      %77 = sbr.rel (%p75) target = $region16
    $region15: #{clip_encode_image.16} parent=5 // pred_region
      // Predicated region
      $region17: #{clip_encode_image.16} parent=15 // pred_check
        %p78 = pneg %p27
      $region18: #{clip_encode_image.16} parent=15 // pred_check_branch
        %80 = sbr.rel (%p78) target = $region20
      $region19: #{clip_encode_image.16} parent=15 // pred_region
        %p81 = scmp.lt.s32.totalorder %s7, 1
        %s82 = scalar_select %p81, %s7, 1
        %s83 = smul.addr %s82, 4
        %s84 = scalar_lea.vmem %s0, %s83
      $region20: #{clip_encode_image.16} parent=15 // pred_fallthru
        _
    $region16: #{clip_encode_image.16} parent=5 // pred_fallthru
      _
    %p85 = scmp.le.s32.totalorder 1, %s7
    %p86 = scmp.lt.s32.totalorder %s7, 3
    %p87 = pnand %p85, %p86
    %p88 = pneg %p87
    // Predicated region
    $region21: #{clip_encode_image.16} parent=5 // pred_check
      _
    $region22: #{clip_encode_image.16} parent=5 // pred_check_branch
      %90 = sbr.rel (%p87) target = $region24
    $region23: #{clip_encode_image.16} parent=5 // pred_region
      %s91 = ssub.s32 %s7, 1
      %p92 = scmp.lt.s32.totalorder %s12, 1
      %s93 = scalar_select %p92, %s12, 1
      %s94 = smul.addr %s93, 4
      %s95 = scalar_lea.vmem %s0, %s94
      %p96 = pneg %p33
      %p97 = pneg %p30
      %p98 = pneg %p59
      %p99 = pneg %p56
      %p100 = scmp.lt.s32.totalorder %s12, 1
      %s101 = scalar_select %p100, %s12, 1
      %s102 = smul.addr %s101, 4
      %s103 = scalar_lea.vmem %s1, %s102
      %p104 = scmp.lt.s32.totalorder %s12, 1
      %s105 = scalar_select %p104, %s12, 1
      %s106 = smul.addr %s105, 4
      %s107 = scalar_lea.vmem %s0, %s106
      %p108 = scmp.lt.s32.totalorder %s12, 1
      %s109 = scalar_select %p108, %s12, 1
      %s110 = smul.addr %s109, 4
      %s111 = scalar_lea.vmem %s1, %s110
      %v113 = vlaneseq
      %v114 = vand.u32 %v113, 127
      %vm115 = vcmp.lt.s32.totalorder %v114, 5
      %v116 = vsel %vm115, 0.0, -1e+30
      %v117 = vld [vmem:[%s107] sm:$0xf]
      %v119 = vunpack.c.l.b16 %v117
      %v120 = vpack.c.b16 %v119, %v119
      %121 = vrot.lane.b32.xlu0 %v120, 96
      %v122 = vpop.permute.xlu0 %121
      %vm123 = vcmask 64512
      %v125 = vsel %vm123, %v117, 0
      %v128 = vsel %vm123, %v122, 0
      %130 = vmatpush.bf16.xpose.msra.mxu0 0
      %131 = vmatpush.bf16.xpose.msra.mxu0 0
      %132 = vmatpush.bf16.xpose.msra.mxu0 0
      %133 = vmatpush.bf16.xpose.msra.mxu0 0
      %134 = vmatpush.bf16.xpose.msra.mxu0 0
      %135 = vmatpush.bf16.xpose.msra.mxu0 0
      %136 = vmatpush.bf16.xpose.msra.mxu0 0
      %137 = vmatpush.bf16.xpose.msra.mxu0 %v128
      %138 = vmatmul.bf16.gmra.mxu0 %v125
      %v139 = vpop.f32.mrf.mxu0
      %v140 = vadd.f32 %v116, %v139
      %v141 = vpop.f32.mrf.mxu0
      %142 = vdwg.mxu0
      %v143 = vsel %vm123, %v140, -inf
      %144 = vmax.xlane.f32.xlu0 %v143
      %v145 = vpop.xlane.xlu0 %144
      %v146 = vsub.f32 %v140, %v145
      %v147 = vmul.f32 %v146, 1.442695
      %v148 = vpow.pop %v147
      %v149 = vsel %vm123, %v148, 0.0
      %150 = vadd.xlane.f32.xlu0 %v149
      %v151 = vpop.xlane.xlu0 %150
      %v152 = vpack.c.bf16 %v148, %v148
      %153 = vrot.lane.b32.xlu0 %v120, 64
      %v154 = vpop.permute.xlu0 %153
      %v156 = vsel %vm123, %v152, 0
      %vm158 = vcmask 1043456
      %v160 = vsel %vm158, %v154, 0
      %162 = vmatpush.bf16.msra.mxu0 0
      %163 = vmatpush.bf16.msra.mxu0 0
      %164 = vmatpush.bf16.msra.mxu0 0
      %165 = vmatpush.bf16.msra.mxu0 0
      %166 = vmatpush.bf16.msra.mxu0 0
      %167 = vmatpush.bf16.msra.mxu0 0
      %168 = vmatpush.bf16.msra.mxu0 0
      %169 = vmatpush.bf16.msra.mxu0 %v160
      %170 = vmatmul.bf16.gmra.mxu0 %v156
      %v171 = vpop.f32.mrf.mxu0
      %v172 = vadd.f32 0.0, %v171
      %v173 = vpop.f32.mrf.mxu0
      %174 = vdwg.mxu0
      %v175 = vrcp.pop %v151
      %v176 = vmul.f32 %v151, %v175
      %v177 = vsub.f32 1.0, %v176
      %v178 = vmul.f32 %v175, %v177
      %v179 = vadd.f32 %v175, %v178
      %vm180 = vweird.f32 %v151
      %vm181 = vweird.f32 %v175
      %vm182 = vmor %vm180, %vm181
      %v183 = vsel %vm182, %v175, %v179
      %v184 = vand.u32 2147483647, %v151
      %vm185 = vcmp.eq.f32.partialorder %v184, 8.507059e+37
      %v186 = vand.u32 %v151, 2147483648
      %v187 = vor.u32 1.1754944e-38, %v186
      %v188 = vsel %vm185, %v187, %v183
      %v189 = vmul.f32 %v172, %v188
      %190 = vrot.lane.b32.xlu0 %v120, 120
      %v191 = vpop.permute.xlu0 %190
      %192 = vrot.lane.b32.xlu0 %v120, 88
      %v193 = vpop.permute.xlu0 %192
      %v195 = vsel %vm123, %v191, 0
      %v198 = vsel %vm123, %v193, 0
      %200 = vmatpush.bf16.xpose.msra.mxu0 0
      %201 = vmatpush.bf16.xpose.msra.mxu0 0
      %202 = vmatpush.bf16.xpose.msra.mxu0 0
      %203 = vmatpush.bf16.xpose.msra.mxu0 0
      %204 = vmatpush.bf16.xpose.msra.mxu0 0
      %205 = vmatpush.bf16.xpose.msra.mxu0 0
      %206 = vmatpush.bf16.xpose.msra.mxu0 0
      %207 = vmatpush.bf16.xpose.msra.mxu0 %v198
      %208 = vmatmul.bf16.gmra.mxu0 %v195
      %v209 = vpop.f32.mrf.mxu0
      %v210 = vadd.f32 %v116, %v209
      %v211 = vpop.f32.mrf.mxu0
      %212 = vdwg.mxu0
      %v213 = vsel %vm123, %v210, -inf
      %214 = vmax.xlane.f32.xlu0 %v213
      %v215 = vpop.xlane.xlu0 %214
      %v216 = vsub.f32 %v210, %v215
      %v217 = vmul.f32 %v216, 1.442695
      %v218 = vpow.pop %v217
      %v219 = vsel %vm123, %v218, 0.0
      %220 = vadd.xlane.f32.xlu0 %v219
      %v221 = vpop.xlane.xlu0 %220
      %v222 = vpack.c.bf16 %v218, %v218
      %223 = vrot.lane.b32.xlu0 %v120, 56
      %v224 = vpop.permute.xlu0 %223
      %v226 = vsel %vm123, %v222, 0
      %v229 = vsel %vm158, %v224, 0
      %231 = vmatpush.bf16.msra.mxu0 0
      %232 = vmatpush.bf16.msra.mxu0 0
      %233 = vmatpush.bf16.msra.mxu0 0
      %234 = vmatpush.bf16.msra.mxu0 0
      %235 = vmatpush.bf16.msra.mxu0 0
      %236 = vmatpush.bf16.msra.mxu0 0
      %237 = vmatpush.bf16.msra.mxu0 0
      %238 = vmatpush.bf16.msra.mxu0 %v229
      %239 = vmatmul.bf16.gmra.mxu0 %v226
      %v240 = vpop.f32.mrf.mxu0
      %v241 = vadd.f32 0.0, %v240
      %v242 = vpop.f32.mrf.mxu0
      %243 = vdwg.mxu0
      %v244 = vrcp.pop %v221
      %v245 = vmul.f32 %v221, %v244
      %v246 = vsub.f32 1.0, %v245
      %v247 = vmul.f32 %v244, %v246
      %v248 = vadd.f32 %v244, %v247
      %vm249 = vweird.f32 %v221
      %vm250 = vweird.f32 %v244
      %vm251 = vmor %vm249, %vm250
      %v252 = vsel %vm251, %v244, %v248
      %v253 = vand.u32 2147483647, %v221
      %vm254 = vcmp.eq.f32.partialorder %v253, 8.507059e+37
      %v255 = vand.u32 %v221, 2147483648
      %v256 = vor.u32 1.1754944e-38, %v255
      %v257 = vsel %vm254, %v256, %v252
      %v258 = vmul.f32 %v241, %v257
      %259 = vrot.lane.b32.xlu0 %v120, 112
      %v260 = vpop.permute.xlu0 %259
      %261 = vrot.lane.b32.xlu0 %v120, 80
      %v262 = vpop.permute.xlu0 %261
      %v264 = vsel %vm123, %v260, 0
      %v267 = vsel %vm123, %v262, 0
      %269 = vmatpush.bf16.xpose.msra.mxu0 0
      %270 = vmatpush.bf16.xpose.msra.mxu0 0
      %271 = vmatpush.bf16.xpose.msra.mxu0 0
      %272 = vmatpush.bf16.xpose.msra.mxu0 0
      %273 = vmatpush.bf16.xpose.msra.mxu0 0
      %274 = vmatpush.bf16.xpose.msra.mxu0 0
      %275 = vmatpush.bf16.xpose.msra.mxu0 0
      %276 = vmatpush.bf16.xpose.msra.mxu0 %v267
      %277 = vmatmul.bf16.gmra.mxu0 %v264
      %v278 = vpop.f32.mrf.mxu0
      %v279 = vadd.f32 %v116, %v278
      %v280 = vpop.f32.mrf.mxu0
      %281 = vdwg.mxu0
      %v282 = vsel %vm123, %v279, -inf
      %283 = vmax.xlane.f32.xlu0 %v282
      %v284 = vpop.xlane.xlu0 %283
      %v285 = vsub.f32 %v279, %v284
      %v286 = vmul.f32 %v285, 1.442695
      %v287 = vpow.pop %v286
      %v288 = vsel %vm123, %v287, 0.0
      %289 = vadd.xlane.f32.xlu0 %v288
      %v290 = vpop.xlane.xlu0 %289
      %v291 = vpack.c.bf16 %v287, %v287
      %292 = vrot.lane.b32.xlu0 %v120, 48
      %v293 = vpop.permute.xlu0 %292
      %v295 = vsel %vm123, %v291, 0
      %v298 = vsel %vm158, %v293, 0
      %300 = vmatpush.bf16.msra.mxu0 0
      %301 = vmatpush.bf16.msra.mxu0 0
      %302 = vmatpush.bf16.msra.mxu0 0
      %303 = vmatpush.bf16.msra.mxu0 0
      %304 = vmatpush.bf16.msra.mxu0 0
      %305 = vmatpush.bf16.msra.mxu0 0
      %306 = vmatpush.bf16.msra.mxu0 0
      %307 = vmatpush.bf16.msra.mxu0 %v298
      %308 = vmatmul.bf16.gmra.mxu0 %v295
      %v309 = vpop.f32.mrf.mxu0
      %v310 = vadd.f32 0.0, %v309
      %v311 = vpop.f32.mrf.mxu0
      %312 = vdwg.mxu0
      %v313 = vrcp.pop %v290
      %v314 = vmul.f32 %v290, %v313
      %v315 = vsub.f32 1.0, %v314
      %v316 = vmul.f32 %v313, %v315
      %v317 = vadd.f32 %v313, %v316
      %vm318 = vweird.f32 %v290
      %vm319 = vweird.f32 %v313
      %vm320 = vmor %vm318, %vm319
      %v321 = vsel %vm320, %v313, %v317
      %v322 = vand.u32 2147483647, %v290
      %vm323 = vcmp.eq.f32.partialorder %v322, 8.507059e+37
      %v324 = vand.u32 %v290, 2147483648
      %v325 = vor.u32 1.1754944e-38, %v324
      %v326 = vsel %vm323, %v325, %v321
      %v327 = vmul.f32 %v310, %v326
      %328 = vrot.lane.b32.xlu0 %v120, 104
      %v329 = vpop.permute.xlu0 %328
      %330 = vrot.lane.b32.xlu0 %v120, 72
      %v331 = vpop.permute.xlu0 %330
      %v333 = vsel %vm123, %v329, 0
      %v336 = vsel %vm123, %v331, 0
      %338 = vmatpush.bf16.xpose.msra.mxu0 0
      %339 = vmatpush.bf16.xpose.msra.mxu0 0
      %340 = vmatpush.bf16.xpose.msra.mxu0 0
      %341 = vmatpush.bf16.xpose.msra.mxu0 0
      %342 = vmatpush.bf16.xpose.msra.mxu0 0
      %343 = vmatpush.bf16.xpose.msra.mxu0 0
      %344 = vmatpush.bf16.xpose.msra.mxu0 0
      %345 = vmatpush.bf16.xpose.msra.mxu0 %v336
      %346 = vmatmul.bf16.gmra.mxu0 %v333
      %v347 = vpop.f32.mrf.mxu0
      %v348 = vadd.f32 %v116, %v347
      %v349 = vpop.f32.mrf.mxu0
      %350 = vdwg.mxu0
      %v351 = vsel %vm123, %v348, -inf
      %352 = vmax.xlane.f32.xlu0 %v351
      %v353 = vpop.xlane.xlu0 %352
      %v354 = vsub.f32 %v348, %v353
      %v355 = vmul.f32 %v354, 1.442695
      %v356 = vpow.pop %v355
      %v357 = vsel %vm123, %v356, 0.0
      %358 = vadd.xlane.f32.xlu0 %v357
      %v359 = vpop.xlane.xlu0 %358
      %v360 = vpack.c.bf16 %v356, %v356
      %361 = vrot.lane.b32.xlu0 %v120, 40
      %v362 = vpop.permute.xlu0 %361
      %v364 = vsel %vm123, %v360, 0
      %v367 = vsel %vm158, %v362, 0
      %369 = vmatpush.bf16.msra.mxu0 0
      %370 = vmatpush.bf16.msra.mxu0 0
      %371 = vmatpush.bf16.msra.mxu0 0
      %372 = vmatpush.bf16.msra.mxu0 0
      %373 = vmatpush.bf16.msra.mxu0 0
      %374 = vmatpush.bf16.msra.mxu0 0
      %375 = vmatpush.bf16.msra.mxu0 0
      %376 = vmatpush.bf16.msra.mxu0 %v367
      %377 = vmatmul.bf16.gmra.mxu0 %v364
      %v378 = vpop.f32.mrf.mxu0
      %v379 = vadd.f32 0.0, %v378
      %v380 = vpop.f32.mrf.mxu0
      %381 = vdwg.mxu0
      %v382 = vrcp.pop %v359
      %v383 = vmul.f32 %v359, %v382
      %v384 = vsub.f32 1.0, %v383
      %v385 = vmul.f32 %v382, %v384
      %v386 = vadd.f32 %v382, %v385
      %vm387 = vweird.f32 %v359
      %vm388 = vweird.f32 %v382
      %vm389 = vmor %vm387, %vm388
      %v390 = vsel %vm389, %v382, %v386
      %v391 = vand.u32 2147483647, %v359
      %vm392 = vcmp.eq.f32.partialorder %v391, 8.507059e+37
      %v393 = vand.u32 %v359, 2147483648
      %v394 = vor.u32 1.1754944e-38, %v393
      %v395 = vsel %vm392, %v394, %v390
      %v396 = vmul.f32 %v379, %v395
      %398 = vrot.lane.b32.xlu0 %v258, 8
      %v399 = vpop.permute.xlu0 %398
      %402 = vrot.lane.b32.xlu0 %v327, 16
      %v403 = vpop.permute.xlu0 %402
      %406 = vrot.lane.b32.xlu0 %v396, 24
      %v407 = vpop.permute.xlu0 %406
      %v409 = vsel %vm123, %v189, %v399
      %vm410 = vcmask 130048
      %v411 = vsel %vm410, %v409, %v403
      %vm412 = vcmask 195584
      %v413 = vsel %vm412, %v411, %v407
      %v414 = vpack.c.bf16 %v413, %v413
      %vm415 = vcmask 257024
      %416 = vst.msk [vmem:[%s111] sm:$0xf] %vm415, %v414
      %p417 = scmp.lt.s32.totalorder %s12, 1
      %s418 = scalar_select %p417, %s12, 1
      %s419 = smul.addr %s418, 4
      %s420 = scalar_lea.vmem %s1, %s419
      // Predicated region
      $region25: #{clip_encode_image.16} parent=23 // pred_check
        %p421 = pneg %p56
      $region26: #{clip_encode_image.16} parent=23 // pred_check_branch
        %423 = sbr.rel (%p421) target = $region28
      $region27: #{clip_encode_image.16} parent=23 // pred_region
        _
      $region28: #{clip_encode_image.16} parent=23 // pred_fallthru
        _
    $region24: #{clip_encode_image.16} parent=5 // pred_fallthru
      _
    %p424 = scmp.le.s32.totalorder 2, %s7
    // Predicated region
    $region29: #{clip_encode_image.16} parent=5 // pred_check
      %p425 = pneg %p424
    $region30: #{clip_encode_image.16} parent=5 // pred_check_branch
      %427 = sbr.rel (%p425) target = $region32
    $region31: #{clip_encode_image.16} parent=5 // pred_region
      %s428 = ssub.s32 %s7, 2
      // Predicated region
      $region33: #{clip_encode_image.16} parent=31 // pred_check
        %p429 = pneg %p62
      $region34: #{clip_encode_image.16} parent=31 // pred_check_branch
        %431 = sbr.rel (%p429) target = $region36
      $region35: #{clip_encode_image.16} parent=31 // pred_region
        %p432 = scmp.lt.s32.totalorder %s13, 1
        %s433 = scalar_select %p432, %s13, 1
        %s434 = smul.addr %s433, 4
        %s435 = scalar_lea.vmem %s1, %s434
      $region36: #{clip_encode_image.16} parent=31 // pred_fallthru
        _
    $region32: #{clip_encode_image.16} parent=5 // pred_fallthru
      _
  $region6: #{clip_encode_image.16} parent=0 // loop_footer
    %s11 = sadd.s32 1, %s7
  $region7: #{clip_encode_image.16} parent=0 // loop_footer_branch
    %6 = sbr.rel target = $region3
  $region8: #{clip_encode_image.16} parent=0 // loop_exit
    _

// kernel: clip_encode_image.17
$region0: #{clip_encode_image.17}
  #allocation0 [shape = 'u32[]', space=smem, size = 0x4, offset = 0x4, fixed_abs, tag = 'smem constant byte address 0x4 - core index']
  #allocation1 [shape = 'u32[72,128]{1,0:T(1,128)}', space=vmem, size = 0x9000, scoped, tag = 'internal scratch']
  %s0 = inlined_call_operand.vmem [shape: bf16[16,32], index: 0, kind: input, shape index: {}]
  %s1 = inlined_call_operand.vmem [shape: bf16[32,32], index: 1, kind: input, shape index: {}]
  %s2 = inlined_call_operand.vmem [shape: f32[1,32], index: 2, kind: input, shape index: {}]
  %s3 = inlined_call_operand.vmem [shape: f32[16,32], index: 3, kind: input, shape index: {}]
  %s4 = inlined_call_operand.vmem [shape: f32[16,32], index: 4, kind: output, shape index: {}]
  %s5 = sld [smem:[#allocation0]]
  $region26: #{clip_encode_image.17} parent=0
    _
  %s7 = ssub.s32 1, %s5
  %s8 = scalar_select 0, %s7, %s5
  // Predicated region
  $region2: #{clip_encode_image.17} parent=0 // pred_check
    _
  $region3: #{clip_encode_image.17} parent=0 // pred_check_branch
    %10 = sbr.rel (0) target = $region5
  $region4: #{clip_encode_image.17} parent=0 // pred_region
    _
  $region5: #{clip_encode_image.17} parent=0 // pred_fallthru
    _
  // Predicated region
  $region6: #{clip_encode_image.17} parent=0 // pred_check
    _
  $region7: #{clip_encode_image.17} parent=0 // pred_check_branch
    %12 = sbr.rel (0) target = $region9
  $region8: #{clip_encode_image.17} parent=0 // pred_region
    _
  $region9: #{clip_encode_image.17} parent=0 // pred_fallthru
    _
  // Predicated region
  $region10: #{clip_encode_image.17} parent=0 // pred_check
    _
  $region11: #{clip_encode_image.17} parent=0 // pred_check_branch
    %14 = sbr.rel (0) target = $region13
  $region12: #{clip_encode_image.17} parent=0 // pred_region
    _
  $region13: #{clip_encode_image.17} parent=0 // pred_fallthru
    _
  // Predicated region
  $region14: #{clip_encode_image.17} parent=0 // pred_check
    _
  $region15: #{clip_encode_image.17} parent=0 // pred_check_branch
    %16 = sbr.rel (0) target = $region17
  $region16: #{clip_encode_image.17} parent=0 // pred_region
    _
  $region17: #{clip_encode_image.17} parent=0 // pred_fallthru
    _
  %v18 = vld [vmem:[%s0] sm:$0xf]
  %v19 = vld [vmem:[%s0 + $0x4] sm:$0xf]
  %v20 = vld [vmem:[%s1] sm:$0xf]
  %v21 = vld [vmem:[%s1 + $0x4] sm:$0xf]
  %v22 = vld [vmem:[%s1 + $0x8] sm:$0xf]
  %v23 = vld [vmem:[%s1 + $0xc] sm:$0xf]
  %v24 = vld [vmem:[%s2] sm:$0x1]
  %v26 = vperm.slane %v24, 0
  %v30 = vunpack.c.l.b16 %v18
  %v31 = vunpack.c.l.b16 %v19
  %v32 = vpack.c.b16 %v31, %v30
  %v37 = vunpack.c.l.b16 %v20
  %v38 = vunpack.c.l.b16 %v21
  %v39 = vunpack.c.l.b16 %v22
  %v40 = vunpack.c.l.b16 %v23
  %v41 = vpack.c.b16 %v38, %v37
  %v42 = vpack.c.b16 %v40, %v39
  %vm45 = vcmask 261120
  %v47 = vsel %vm45, %v32, 0
  %49 = vmatpush.bf16.msra.mxu0 0
  %50 = vmatpush.bf16.msra.mxu0 0
  %51 = vmatpush.bf16.msra.mxu0 0
  %52 = vmatpush.bf16.msra.mxu0 0
  %53 = vmatpush.bf16.msra.mxu0 0
  %54 = vmatpush.bf16.msra.mxu0 0
  %55 = vmatpush.bf16.msra.mxu0 %v42
  %56 = vmatpush.bf16.msra.mxu0 %v41
  %57 = vmatmul.bf16.gmra.mxu0 %v47
  %v58 = vpop.f32.mrf.mxu0
  %v59 = vadd.f32 %v26, %v58
  %v60 = vpop.f32.mrf.mxu0
  %v61 = vadd.f32 %v26, %v60
  %62 = vdwg.mxu0
  %v63 = vld [vmem:[%s3] sm:$0xff]
  %v64 = vld [vmem:[%s3 + $0x8] sm:$0xff]
  %v65 = vadd.f32 %v59, %v63
  %v66 = vadd.f32 %v61, %v64
  %67 = vst.msk [vmem:[%s4] sm:$0xff] %vm45, %v65
  %68 = vst.msk [vmem:[%s4 + $0x8] sm:$0xff] %vm45, %v66
  // Predicated region
  $region18: #{clip_encode_image.17} parent=0 // pred_check
    _
  $region19: #{clip_encode_image.17} parent=0 // pred_check_branch
    %70 = sbr.rel (0) target = $region21
  $region20: #{clip_encode_image.17} parent=0 // pred_region
    _
  $region21: #{clip_encode_image.17} parent=0 // pred_fallthru
    _
  // Predicated region
  $region22: #{clip_encode_image.17} parent=0 // pred_check
    _
  $region23: #{clip_encode_image.17} parent=0 // pred_check_branch
    %72 = sbr.rel (0) target = $region25
  $region24: #{clip_encode_image.17} parent=0 // pred_region
    _
  $region25: #{clip_encode_image.17} parent=0 // pred_fallthru
    _

// kernel: clip_encode_image.18
$region0: #{clip_encode_image.18}
  #allocation0 [shape = 'u32[]', space=smem, size = 0x4, offset = 0x4, fixed_abs, tag = 'smem constant byte address 0x4 - core index']
  #allocation1 [shape = 'u32[72,128]{1,0:T(1,128)}', space=vmem, size = 0x9000, scoped, tag = 'internal scratch']
  %s0 = inlined_call_operand.vmem [shape: f32[16,32], index: 0, kind: input, shape index: {}]
  %s1 = inlined_call_operand.vmem [shape: f32[1,32], index: 1, kind: input, shape index: {}]
  %s2 = inlined_call_operand.vmem [shape: f32[1,32], index: 2, kind: input, shape index: {}]
  %s3 = inlined_call_operand.vmem [shape: bf16[32,128], index: 3, kind: input, shape index: {}]
  %s4 = inlined_call_operand.vmem [shape: f32[1,128], index: 4, kind: input, shape index: {}]
  %s5 = inlined_call_operand.vmem [shape: bf16[16,128], index: 5, kind: output, shape index: {}]
  %s6 = sld [smem:[#allocation0]]
  $region30: #{clip_encode_image.18} parent=0
    _
  %s8 = ssub.s32 1, %s6
  %s9 = scalar_select 0, %s8, %s6
  // Predicated region
  $region2: #{clip_encode_image.18} parent=0 // pred_check
    _
  $region3: #{clip_encode_image.18} parent=0 // pred_check_branch
    %11 = sbr.rel (0) target = $region5
  $region4: #{clip_encode_image.18} parent=0 // pred_region
    _
  $region5: #{clip_encode_image.18} parent=0 // pred_fallthru
    _
  // Predicated region
  $region6: #{clip_encode_image.18} parent=0 // pred_check
    _
  $region7: #{clip_encode_image.18} parent=0 // pred_check_branch
    %13 = sbr.rel (0) target = $region9
  $region8: #{clip_encode_image.18} parent=0 // pred_region
    _
  $region9: #{clip_encode_image.18} parent=0 // pred_fallthru
    _
  // Predicated region
  $region10: #{clip_encode_image.18} parent=0 // pred_check
    _
  $region11: #{clip_encode_image.18} parent=0 // pred_check_branch
    %15 = sbr.rel (0) target = $region13
  $region12: #{clip_encode_image.18} parent=0 // pred_region
    _
  $region13: #{clip_encode_image.18} parent=0 // pred_fallthru
    _
  // Predicated region
  $region14: #{clip_encode_image.18} parent=0 // pred_check
    _
  $region15: #{clip_encode_image.18} parent=0 // pred_check_branch
    %17 = sbr.rel (0) target = $region17
  $region16: #{clip_encode_image.18} parent=0 // pred_region
    _
  $region17: #{clip_encode_image.18} parent=0 // pred_fallthru
    _
  // Predicated region
  $region18: #{clip_encode_image.18} parent=0 // pred_check
    _
  $region19: #{clip_encode_image.18} parent=0 // pred_check_branch
    %19 = sbr.rel (0) target = $region21
  $region20: #{clip_encode_image.18} parent=0 // pred_region
    _
  $region21: #{clip_encode_image.18} parent=0 // pred_fallthru
    _
  %v21 = vld [vmem:[%s0] sm:$0xff]
  %v22 = vld [vmem:[%s0 + $0x8] sm:$0xff]
  %vm23 = vcmask 261120
  %v24 = vsel %vm23, %v21, 0.0
  %25 = vadd.xlane.f32.xlu0 %v24
  %v26 = vpop.xlane.xlu0 %25
  %v27 = vsel %vm23, %v22, 0.0
  %28 = vadd.xlane.f32.xlu0 %v27
  %v29 = vpop.xlane.xlu0 %28
  %v30 = vrcp.pop 32.0
  %v31 = vmul.f32 32.0, %v30
  %v32 = vsub.f32 1.0, %v31
  %v33 = vmul.f32 %v30, %v32
  %v34 = vadd.f32 %v30, %v33
  %vm35 = vweird.f32 %v30
  %v36 = vsel %vm35, %v30, %v34
  %v37 = vmul.f32 %v26, %v36
  %v38 = vmul.f32 %v29, %v36
  %v39 = vsub.f32 %v21, %v37
  %v40 = vsub.f32 %v22, %v38
  %v41 = vmul.f32 %v39, %v39
  %v42 = vmul.f32 %v40, %v40
  %v43 = vsel %vm23, %v41, 0.0
  %44 = vadd.xlane.f32.xlu0 %v43
  %v45 = vpop.xlane.xlu0 %44
  %v46 = vsel %vm23, %v42, 0.0
  %47 = vadd.xlane.f32.xlu0 %v46
  %v48 = vpop.xlane.xlu0 %47
  %v49 = vmul.f32 %v45, %v36
  %v50 = vmul.f32 %v48, %v36
  %v51 = vadd.f32 %v49, 1e-05
  %v52 = vadd.f32 %v50, 1e-05
  %v53 = vrsqrt.pop %v51
  %v54 = vmul.f32 %v53, %v51
  %v55 = vmul.f32 %v54, %v53
  %v56 = vmul.f32 0.5, %v55
  %v57 = vsub.f32 1.5, %v56
  %v58 = vmul.f32 %v53, %v57
  %vm59 = vweird.f32 %v51
  %vm60 = vweird.f32 %v53
  %vm61 = vmor %vm59, %vm60
  %v62 = vsel %vm61, %v53, %v58
  %v63 = vrsqrt.pop %v52
  %v64 = vmul.f32 %v63, %v52
  %v65 = vmul.f32 %v64, %v63
  %v66 = vmul.f32 0.5, %v65
  %v67 = vsub.f32 1.5, %v66
  %v68 = vmul.f32 %v63, %v67
  %vm69 = vweird.f32 %v52
  %vm70 = vweird.f32 %v63
  %vm71 = vmor %vm69, %vm70
  %v72 = vsel %vm71, %v63, %v68
  %v73 = vmul.f32 %v39, %v62
  %v74 = vmul.f32 %v40, %v72
  %v75 = vld [vmem:[%s1] sm:$0x1]
  %v77 = vperm.slane %v75, 0
  %v79 = vmul.f32 %v73, %v77
  %v80 = vmul.f32 %v74, %v77
  %v81 = vld [vmem:[%s2] sm:$0x1]
  %v83 = vperm.slane %v81, 0
  %v85 = vadd.f32 %v79, %v83
  %v86 = vadd.f32 %v80, %v83
  %v87 = vpack.c.bf16 %v86, %v85
  %v88 = vld [vmem:[%s3] sm:$0xf]
  %v89 = vld [vmem:[%s3 + $0x4] sm:$0xf]
  %v90 = vld [vmem:[%s3 + $0x8] sm:$0xf]
  %v91 = vld [vmem:[%s3 + $0xc] sm:$0xf]
  %v92 = vld [vmem:[%s4] sm:$0x1]
  %v94 = vperm.slane %v92, 0
  %v100 = vunpack.c.l.b16 %v88
  %v101 = vunpack.c.l.b16 %v89
  %v102 = vunpack.c.l.b16 %v90
  %v103 = vunpack.c.l.b16 %v91
  %v104 = vpack.c.b16 %v101, %v100
  %v105 = vpack.c.b16 %v103, %v102
  %v109 = vsel %vm23, %v87, 0
  %111 = vmatpush.bf16.msra.mxu0 0
  %112 = vmatpush.bf16.msra.mxu0 0
  %113 = vmatpush.bf16.msra.mxu0 0
  %114 = vmatpush.bf16.msra.mxu0 0
  %115 = vmatpush.bf16.msra.mxu0 0
  %116 = vmatpush.bf16.msra.mxu0 0
  %117 = vmatpush.bf16.msra.mxu0 %v105
  %118 = vmatpush.bf16.msra.mxu0 %v104
  %119 = vmatmul.bf16.gmra.mxu0 %v109
  %v120 = vpop.f32.mrf.mxu0
  %v121 = vadd.f32 %v94, %v120
  %v122 = vpop.f32.mrf.mxu0
  %v123 = vadd.f32 %v94, %v122
  %124 = vdwg.mxu0
  %v125 = vmul.f32 %v121, 1.702
  %v126 = vmul.f32 %v123, 1.702
  %v127 = vxor.u32 %v125, 2147483648
  %v128 = vxor.u32 %v126, 2147483648
  %v129 = vmul.f32 %v127, 1.442695
  %v130 = vpow.pop %v129
  %v131 = vmul.f32 %v128, 1.442695
  %v132 = vpow.pop %v131
  %v133 = vadd.f32 %v130, 1.0
  %v134 = vadd.f32 %v132, 1.0
  %v135 = vrcp.pop %v133
  %v136 = vmul.f32 %v133, %v135
  %v137 = vsub.f32 1.0, %v136
  %v138 = vmul.f32 %v135, %v137
  %v139 = vadd.f32 %v135, %v138
  %vm140 = vweird.f32 %v133
  %vm141 = vweird.f32 %v135
  %vm142 = vmor %vm140, %vm141
  %v143 = vsel %vm142, %v135, %v139
  %v144 = vand.u32 2147483647, %v133
  %vm145 = vcmp.eq.f32.partialorder %v144, 8.507059e+37
  %v146 = vand.u32 %v133, 2147483648
  %v147 = vor.u32 1.1754944e-38, %v146
  %v148 = vsel %vm145, %v147, %v143
  %v149 = vmul.f32 1.0, %v148
  %v150 = vrcp.pop %v134
  %v151 = vmul.f32 %v134, %v150
  %v152 = vsub.f32 1.0, %v151
  %v153 = vmul.f32 %v150, %v152
  %v154 = vadd.f32 %v150, %v153
  %vm155 = vweird.f32 %v134
  %vm156 = vweird.f32 %v150
  %vm157 = vmor %vm155, %vm156
  %v158 = vsel %vm157, %v150, %v154
  %v159 = vand.u32 2147483647, %v134
  %vm160 = vcmp.eq.f32.partialorder %v159, 8.507059e+37
  %v161 = vand.u32 %v134, 2147483648
  %v162 = vor.u32 1.1754944e-38, %v161
  %v163 = vsel %vm160, %v162, %v158
  %v164 = vmul.f32 1.0, %v163
  %v165 = vmul.f32 %v121, %v149
  %v166 = vmul.f32 %v123, %v164
  %v167 = vpack.c.bf16 %v165, %v165
  %v168 = vpack.c.bf16 %v166, %v166
  %169 = vst [vmem:[%s5] sm:$0xf] %v167
  %170 = vst [vmem:[%s5 + $0x4] sm:$0xf] %v168
  // Predicated region
  $region22: #{clip_encode_image.18} parent=0 // pred_check
    _
  $region23: #{clip_encode_image.18} parent=0 // pred_check_branch
    %172 = sbr.rel (0) target = $region25
  $region24: #{clip_encode_image.18} parent=0 // pred_region
    _
  $region25: #{clip_encode_image.18} parent=0 // pred_fallthru
    _
  // Predicated region
  $region26: #{clip_encode_image.18} parent=0 // pred_check
    _
  $region27: #{clip_encode_image.18} parent=0 // pred_check_branch
    %174 = sbr.rel (0) target = $region29
  $region28: #{clip_encode_image.18} parent=0 // pred_region
    _
  $region29: #{clip_encode_image.18} parent=0 // pred_fallthru
    _

// kernel: clip_encode_image.19
$region0: #{clip_encode_image.19}
  #allocation0 [shape = 'u32[]', space=smem, size = 0x4, offset = 0x4, fixed_abs, tag = 'smem constant byte address 0x4 - core index']
  #allocation1 [shape = 'u32[72,128]{1,0:T(1,128)}', space=vmem, size = 0x9000, scoped, tag = 'internal scratch']
  %s0 = inlined_call_operand.vmem [shape: bf16[16,128], index: 0, kind: input, shape index: {}]
  %s1 = inlined_call_operand.vmem [shape: bf16[128,32], index: 1, kind: input, shape index: {}]
  %s2 = inlined_call_operand.vmem [shape: f32[1,32], index: 2, kind: input, shape index: {}]
  %s3 = inlined_call_operand.vmem [shape: f32[16,32], index: 3, kind: input, shape index: {}]
  %s4 = inlined_call_operand.vmem [shape: f32[16,32], index: 4, kind: output, shape index: {}]
  %s5 = sld [smem:[#allocation0]]
  $region26: #{clip_encode_image.19} parent=0
    _
  %s7 = ssub.s32 1, %s5
  %s8 = scalar_select 0, %s7, %s5
  // Predicated region
  $region2: #{clip_encode_image.19} parent=0 // pred_check
    _
  $region3: #{clip_encode_image.19} parent=0 // pred_check_branch
    %10 = sbr.rel (0) target = $region5
  $region4: #{clip_encode_image.19} parent=0 // pred_region
    _
  $region5: #{clip_encode_image.19} parent=0 // pred_fallthru
    _
  // Predicated region
  $region6: #{clip_encode_image.19} parent=0 // pred_check
    _
  $region7: #{clip_encode_image.19} parent=0 // pred_check_branch
    %12 = sbr.rel (0) target = $region9
  $region8: #{clip_encode_image.19} parent=0 // pred_region
    _
  $region9: #{clip_encode_image.19} parent=0 // pred_fallthru
    _
  // Predicated region
  $region10: #{clip_encode_image.19} parent=0 // pred_check
    _
  $region11: #{clip_encode_image.19} parent=0 // pred_check_branch
    %14 = sbr.rel (0) target = $region13
  $region12: #{clip_encode_image.19} parent=0 // pred_region
    _
  $region13: #{clip_encode_image.19} parent=0 // pred_fallthru
    _
  // Predicated region
  $region14: #{clip_encode_image.19} parent=0 // pred_check
    _
  $region15: #{clip_encode_image.19} parent=0 // pred_check_branch
    %16 = sbr.rel (0) target = $region17
  $region16: #{clip_encode_image.19} parent=0 // pred_region
    _
  $region17: #{clip_encode_image.19} parent=0 // pred_fallthru
    _
  %v17 = vld [vmem:[%s0] sm:$0xf]
  %v18 = vld [vmem:[%s0 + $0x4] sm:$0xf]
  %v19 = vld [vmem:[%s1] sm:$0xf]
  %v20 = vld [vmem:[%s1 + $0x4] sm:$0xf]
  %v21 = vld [vmem:[%s1 + $0x8] sm:$0xf]
  %v22 = vld [vmem:[%s1 + $0xc] sm:$0xf]
  %v23 = vld [vmem:[%s1 + $0x10] sm:$0xf]
  %v24 = vld [vmem:[%s1 + $0x14] sm:$0xf]
  %v25 = vld [vmem:[%s1 + $0x18] sm:$0xf]
  %v26 = vld [vmem:[%s1 + $0x1c] sm:$0xf]
  %v27 = vld [vmem:[%s1 + $0x20] sm:$0xf]
  %v28 = vld [vmem:[%s1 + $0x24] sm:$0xf]
  %v29 = vld [vmem:[%s1 + $0x28] sm:$0xf]
  %v30 = vld [vmem:[%s1 + $0x2c] sm:$0xf]
  %v31 = vld [vmem:[%s1 + $0x30] sm:$0xf]
  %v32 = vld [vmem:[%s1 + $0x34] sm:$0xf]
  %v33 = vld [vmem:[%s1 + $0x38] sm:$0xf]
  %v34 = vld [vmem:[%s1 + $0x3c] sm:$0xf]
  %v35 = vld [vmem:[%s2] sm:$0x1]
  %v37 = vperm.slane %v35, 0
  %v41 = vunpack.c.l.b16 %v17
  %v42 = vunpack.c.l.b16 %v18
  %v43 = vpack.c.b16 %v42, %v41
  %v61 = vunpack.c.l.b16 %v19
  %v62 = vunpack.c.l.b16 %v20
  %v63 = vunpack.c.l.b16 %v21
  %v64 = vunpack.c.l.b16 %v22
  %v65 = vunpack.c.l.b16 %v23
  %v66 = vunpack.c.l.b16 %v24
  %v67 = vunpack.c.l.b16 %v25
  %v68 = vunpack.c.l.b16 %v26
  %v69 = vunpack.c.l.b16 %v27
  %v70 = vunpack.c.l.b16 %v28
  %v71 = vunpack.c.l.b16 %v29
  %v72 = vunpack.c.l.b16 %v30
  %v73 = vunpack.c.l.b16 %v31
  %v74 = vunpack.c.l.b16 %v32
  %v75 = vunpack.c.l.b16 %v33
  %v76 = vunpack.c.l.b16 %v34
  %v77 = vpack.c.b16 %v62, %v61
  %v78 = vpack.c.b16 %v64, %v63
  %v79 = vpack.c.b16 %v66, %v65
  %v80 = vpack.c.b16 %v68, %v67
  %v81 = vpack.c.b16 %v70, %v69
  %v82 = vpack.c.b16 %v72, %v71
  %v83 = vpack.c.b16 %v74, %v73
  %v84 = vpack.c.b16 %v76, %v75
  %93 = vmatpush.bf16.msra.mxu0 %v84
  %94 = vmatpush.bf16.msra.mxu0 %v83
  %95 = vmatpush.bf16.msra.mxu0 %v82
  %96 = vmatpush.bf16.msra.mxu0 %v81
  %97 = vmatpush.bf16.msra.mxu0 %v80
  %98 = vmatpush.bf16.msra.mxu0 %v79
  %99 = vmatpush.bf16.msra.mxu0 %v78
  %100 = vmatpush.bf16.msra.mxu0 %v77
  %101 = vmatmul.bf16.gmra.mxu0 %v43
  %v102 = vpop.f32.mrf.mxu0
  %v103 = vadd.f32 %v37, %v102
  %v104 = vpop.f32.mrf.mxu0
  %v105 = vadd.f32 %v37, %v104
  %106 = vdwg.mxu0
  %v107 = vld [vmem:[%s3] sm:$0xff]
  %v108 = vld [vmem:[%s3 + $0x8] sm:$0xff]
  %v109 = vadd.f32 %v103, %v107
  %v110 = vadd.f32 %v105, %v108
  %vm111 = vcmask 261120
  %112 = vst.msk [vmem:[%s4] sm:$0xff] %vm111, %v109
  %113 = vst.msk [vmem:[%s4 + $0x8] sm:$0xff] %vm111, %v110
  // Predicated region
  $region18: #{clip_encode_image.19} parent=0 // pred_check
    _
  $region19: #{clip_encode_image.19} parent=0 // pred_check_branch
    %115 = sbr.rel (0) target = $region21
  $region20: #{clip_encode_image.19} parent=0 // pred_region
    _
  $region21: #{clip_encode_image.19} parent=0 // pred_fallthru
    _
  // Predicated region
  $region22: #{clip_encode_image.19} parent=0 // pred_check
    _
  $region23: #{clip_encode_image.19} parent=0 // pred_check_branch
    %117 = sbr.rel (0) target = $region25
  $region24: #{clip_encode_image.19} parent=0 // pred_region
    _
  $region25: #{clip_encode_image.19} parent=0 // pred_fallthru
    _

// kernel: clip_encode_image.25
$region0: #{clip_encode_image.25}
  #allocation0 [shape = 'u32[]', space=smem, size = 0x4, offset = 0x4, fixed_abs, tag = 'smem constant byte address 0x4 - core index']
  #allocation1 [shape = 'u32[72,128]{1,0:T(1,128)}', space=vmem, size = 0x9000, scoped, tag = 'internal scratch']
  %s0 = inlined_call_operand.vmem [shape: f32[8,32], index: 0, kind: input, shape index: {}]
  %s1 = inlined_call_operand.vmem [shape: f32[1,32], index: 1, kind: input, shape index: {}]
  %s2 = inlined_call_operand.vmem [shape: f32[1,32], index: 2, kind: input, shape index: {}]
  %s3 = inlined_call_operand.vmem [shape: bf16[32,16], index: 3, kind: input, shape index: {}]
  %s4 = inlined_call_operand.vmem [shape: f32[8,16], index: 4, kind: output, shape index: {}]
  %s5 = sld [smem:[#allocation0]]
  $region26: #{clip_encode_image.25} parent=0
    _
  %s7 = ssub.s32 1, %s5
  %s8 = scalar_select 0, %s7, %s5
  // Predicated region
  $region2: #{clip_encode_image.25} parent=0 // pred_check
    _
  $region3: #{clip_encode_image.25} parent=0 // pred_check_branch
    %10 = sbr.rel (0) target = $region5
  $region4: #{clip_encode_image.25} parent=0 // pred_region
    _
  $region5: #{clip_encode_image.25} parent=0 // pred_fallthru
    _
  // Predicated region
  $region6: #{clip_encode_image.25} parent=0 // pred_check
    _
  $region7: #{clip_encode_image.25} parent=0 // pred_check_branch
    %12 = sbr.rel (0) target = $region9
  $region8: #{clip_encode_image.25} parent=0 // pred_region
    _
  $region9: #{clip_encode_image.25} parent=0 // pred_fallthru
    _
  // Predicated region
  $region10: #{clip_encode_image.25} parent=0 // pred_check
    _
  $region11: #{clip_encode_image.25} parent=0 // pred_check_branch
    %14 = sbr.rel (0) target = $region13
  $region12: #{clip_encode_image.25} parent=0 // pred_region
    _
  $region13: #{clip_encode_image.25} parent=0 // pred_fallthru
    _
  // Predicated region
  $region14: #{clip_encode_image.25} parent=0 // pred_check
    _
  $region15: #{clip_encode_image.25} parent=0 // pred_check_branch
    %16 = sbr.rel (0) target = $region17
  $region16: #{clip_encode_image.25} parent=0 // pred_region
    _
  $region17: #{clip_encode_image.25} parent=0 // pred_fallthru
    _
  %v18 = vld [vmem:[%s0] sm:$0xff]
  %vm19 = vcmask 261120
  %v20 = vsel %vm19, %v18, 0.0
  %21 = vadd.xlane.f32.xlu0 %v20
  %v22 = vpop.xlane.xlu0 %21
  %v23 = vrcp.pop 32.0
  %v24 = vmul.f32 32.0, %v23
  %v25 = vsub.f32 1.0, %v24
  %v26 = vmul.f32 %v23, %v25
  %v27 = vadd.f32 %v23, %v26
  %vm28 = vweird.f32 %v23
  %v29 = vsel %vm28, %v23, %v27
  %v30 = vmul.f32 %v22, %v29
  %v31 = vsub.f32 %v18, %v30
  %v32 = vmul.f32 %v31, %v31
  %v33 = vsel %vm19, %v32, 0.0
  %34 = vadd.xlane.f32.xlu0 %v33
  %v35 = vpop.xlane.xlu0 %34
  %v36 = vmul.f32 %v35, %v29
  %v37 = vadd.f32 %v36, 1e-05
  %v38 = vrsqrt.pop %v37
  %v39 = vmul.f32 %v38, %v37
  %v40 = vmul.f32 %v39, %v38
  %v41 = vmul.f32 0.5, %v40
  %v42 = vsub.f32 1.5, %v41
  %v43 = vmul.f32 %v38, %v42
  %vm44 = vweird.f32 %v37
  %vm45 = vweird.f32 %v38
  %vm46 = vmor %vm44, %vm45
  %v47 = vsel %vm46, %v38, %v43
  %v48 = vmul.f32 %v31, %v47
  %v49 = vld [vmem:[%s1] sm:$0x1]
  %v51 = vperm.slane %v49, 0
  %v53 = vmul.f32 %v48, %v51
  %v54 = vld [vmem:[%s2] sm:$0x1]
  %v56 = vperm.slane %v54, 0
  %v58 = vadd.f32 %v53, %v56
  %v59 = vpack.c.bf16 %v58, %v58
  %v60 = vld [vmem:[%s3] sm:$0xf]
  %v61 = vld [vmem:[%s3 + $0x4] sm:$0xf]
  %v62 = vld [vmem:[%s3 + $0x8] sm:$0xf]
  %v63 = vld [vmem:[%s3 + $0xc] sm:$0xf]
  %v68 = vunpack.c.l.b16 %v60
  %v69 = vunpack.c.l.b16 %v61
  %v70 = vunpack.c.l.b16 %v62
  %v71 = vunpack.c.l.b16 %v63
  %v72 = vpack.c.b16 %v69, %v68
  %v73 = vpack.c.b16 %v71, %v70
  %v77 = vsel %vm19, %v59, 0
  %79 = vmatpush.bf16.msra.mxu0 0
  %80 = vmatpush.bf16.msra.mxu0 0
  %81 = vmatpush.bf16.msra.mxu0 0
  %82 = vmatpush.bf16.msra.mxu0 0
  %83 = vmatpush.bf16.msra.mxu0 0
  %84 = vmatpush.bf16.msra.mxu0 0
  %85 = vmatpush.bf16.msra.mxu0 %v73
  %86 = vmatpush.bf16.msra.mxu0 %v72
  %87 = vmatmul.bf16.gmra.mxu0 %v77
  %v88 = vpop.f32.mrf.mxu0
  %v89 = vadd.f32 0.0, %v88
  %v90 = vpop.f32.mrf.mxu0
  %91 = vdwg.mxu0
  %vm92 = vcmask 130048
  %93 = vst.msk [vmem:[%s4] sm:$0xff] %vm92, %v89
  // Predicated region
  $region18: #{clip_encode_image.25} parent=0 // pred_check
    _
  $region19: #{clip_encode_image.25} parent=0 // pred_check_branch
    %95 = sbr.rel (0) target = $region21
  $region20: #{clip_encode_image.25} parent=0 // pred_region
    _
  $region21: #{clip_encode_image.25} parent=0 // pred_fallthru
    _
  // Predicated region
  $region22: #{clip_encode_image.25} parent=0 // pred_check
    _
  $region23: #{clip_encode_image.25} parent=0 // pred_check_branch
    %97 = sbr.rel (0) target = $region25
  $region24: #{clip_encode_image.25} parent=0 // pred_region
    _
  $region25: #{clip_encode_image.25} parent=0 // pred_fallthru
    _

</llo_original>
